<compile_context>
chip_gen: v5e
topology: v5e:2x2
jax: 0.10.0
libtpu: 0.0.40
codegen_flags: <defaults>
</compile_context>

<pallas_src>
import functools
import math

import jax
import jax.numpy as jnp
from jax.experimental import pallas as pl
from jax.experimental.pallas import tpu as pltpu

# ----------------------- model hyper-parameters --------------------------
NUM_NODE_FEATURES = 4
NUM_CLASSES = 4
ENCODER_EMBED_DIM = 32
ENCODER_FFN_EMBED_DIM = 64
ENCODER_LAYERS = 2
ENCODER_ATTENTION_HEADS = 4
HEAD_DIM = ENCODER_EMBED_DIM // ENCODER_ATTENTION_HEADS
LAP_PE_K = 4
LN_EPS = 1e-5

N_NODES = 8
N_EDGES = 16
N_GRAPHS = 4

# ---- f32 parameter-slab row layout (sections start on sublane multiples of 8)
_ROW_NODE_PROJ = 0                         # 8 rows: [node_w ; lap_wa + lap_wb]
_ROW_LAP_WA = 8                            # K rows
_ROW_LAP_WB = 16                           # K rows
_ROW_MISC = 24                             # oemb0, oemb1, node_b, fin_g, fin_b, out_b
_ROW_OUT_WT = 32                           # C rows: embed_out.weight (C, D)
_ROW_LVEC = 40                             # 8 rows per encoder layer (LN / biases)
_FVEC_ROWS = _ROW_LVEC + 8 * ENCODER_LAYERS            # 56
_FVEC_LANES = 3 * ENCODER_EMBED_DIM                    # 96 (widest row = qkv bias)

_OUT_LANES = 128                            # lane-dense packed output width


# ----------------------------- fused kernel ------------------------------
def _tokengt_fwd_kernel(g_ref, fvec_ref, lw_ref, out_ref, *, n_nodes, n_edges):
    """Full TokenGT forward for one graph: tokenize + L pre-norm layers + head."""
    D = ENCODER_EMBED_DIM
    F = ENCODER_FFN_EMBED_DIM
    H = ENCODER_ATTENTION_HEADS
    HD = HEAD_DIM
    K = LAP_PE_K
    NF = NUM_NODE_FEATURES
    C = NUM_CLASSES
    N, E = n_nodes, n_edges
    T = N + E
    bf16, f32 = jnp.bfloat16, jnp.float32

    def layer_norm(v, g, b):
        # Single-pass LN: mean and E[x^2] are independent reductions (shorter
        # serial XLU chain than mean -> centered variance).  Safe at D=32 / f32.
        mu = jnp.mean(v, axis=-1, keepdims=True)
        m2 = jnp.mean(v * v, axis=-1, keepdims=True)
        var = m2 - mu * mu
        return (v - mu) * jax.lax.rsqrt(var + LN_EPS) * g + b

    # ----------------------- unpack parameter slab -------------------------
    fv = fvec_ref[...]                                            # (56, 96) f32
    node_proj_w = fv[0:NF + K, 0:D].astype(bf16)                  # [node_w ; lap_wa+lap_wb]
    lap_wa = fv[_ROW_LAP_WA:_ROW_LAP_WA + K, 0:D].astype(bf16)
    lap_wb = fv[_ROW_LAP_WB:_ROW_LAP_WB + K, 0:D].astype(bf16)
    oemb0 = fv[_ROW_MISC + 0:_ROW_MISC + 1, 0:D]
    oemb1 = fv[_ROW_MISC + 1:_ROW_MISC + 2, 0:D]
    node_b = fv[_ROW_MISC + 2:_ROW_MISC + 3, 0:D]
    fin_g = fv[_ROW_MISC + 3:_ROW_MISC + 4, 0:D]
    fin_b = fv[_ROW_MISC + 4:_ROW_MISC + 5, 0:D]
    out_b = fv[_ROW_MISC + 5:_ROW_MISC + 6, 0:C]
    out_wt = fv[_ROW_OUT_WT:_ROW_OUT_WT + C, 0:D].astype(bf16)    # embed_out.weight (C, D)

    # ---------------- tokenize (gathers as one-hot matmuls) ----------------
    gdat = g_ref[...]                                             # (T, NF+K) f32
    node_in = gdat[0:N, :].astype(bf16)                           # [x | lap]  (N, NF+K)
    lap = gdat[0:N, NF:NF + K].astype(bf16)                       # (N, K)
    src = gdat[N:T, 0:1].astype(jnp.int32)                        # (E, 1)
    dst = gdat[N:T, 1:2].astype(jnp.int32)

    # node tokens: node_encoder(x) + lap_encoder([pe|pe]) + order_emb[1]
    # ([x|lap] @ [node_w ; lap_wa+lap_wb] fuses the two node-token matmuls)
    node_tok = (jnp.dot(node_in, node_proj_w, preferred_element_type=f32)
                + node_b + oemb1)                                 # (N, D)

    # edge tokens: lap_encoder([pe[src]|pe[dst]]) + order_emb[src == dst]
    lap_pa = jnp.dot(lap, lap_wa, preferred_element_type=f32)     # (N, D)
    lap_pb = jnp.dot(lap, lap_wb, preferred_element_type=f32)     # (N, D)
    lap_stack = jnp.concatenate([lap_pa, lap_pb], axis=0).astype(bf16)   # (2N, D)
    ids = jax.lax.broadcasted_iota(jnp.int32, (E, 2 * N), 1)
    edge_oh = jnp.logical_or(ids == src, (ids - N) == dst)        # gather-as-matmul
    edge_oh = edge_oh.astype(f32).astype(bf16)                    # (E, 2N) exact 0/1
    edge_lap = jnp.dot(edge_oh, lap_stack, preferred_element_type=f32)   # (E, D)
    is_loop = (src == dst).astype(f32)                            # (E, 1)
    edge_tok = edge_lap + oemb0 + is_loop * (oemb1 - oemb0)

    tok = jnp.concatenate([node_tok, edge_tok], axis=0)           # (T, D) f32, VMEM-resident

    # --------------- transformer encoder layers (pre-norm) -----------------
    scale = 1.0 / math.sqrt(HD)
    feats = []
    for l in range(ENCODER_LAYERS):                               # statically unrolled
        wslab = lw_ref[l]                                         # (D, 4D+2F) bf16
        wqkv = wslab[:, 0:3 * D]
        wo = wslab[:, 3 * D:4 * D]
        w1 = wslab[:, 4 * D:4 * D + F]
        w2t = wslab[:, 4 * D + F:4 * D + 2 * F]                   # fc2.weight == W2^T (D, F)
        lvec = fv[_ROW_LVEC + 8 * l:_ROW_LVEC + 8 * (l + 1), :]   # (8, 96) f32
        ln1_g = lvec[0:1, 0:D]
        ln1_b = lvec[1:2, 0:D]
        bqkv = lvec[2:3, 0:3 * D]
        bo = lvec[3:4, 0:D]
        ln2_g = lvec[4:5, 0:D]
        ln2_b = lvec[5:6, 0:D]
        b1 = lvec[6:7, 0:F]
        b2 = lvec[7:8, 0:D]

        # ---- self-attention block (pre-LN), single fused QKV matmul ----
        xn = layer_norm(tok, ln1_g, ln1_b)
        qkv = jnp.dot(xn.astype(bf16), wqkv, preferred_element_type=f32) + bqkv
        q = (qkv[:, 0:D] * scale).astype(bf16)                    # scale applied once
        k = qkv[:, D:2 * D].astype(bf16)
        v = qkv[:, 2 * D:3 * D].astype(bf16)

        # per-head score matmuls, then head-BATCHED softmax: stack the H (T,T)
        # score blocks along sublanes (T=24 is a multiple of 8 -> aligned) and
        # issue max / exp / reciprocal / sum once for all heads.
        s_list = []
        for h in range(H):
            lo, hi = h * HD, (h + 1) * HD
            s_list.append(jax.lax.dot_general(
                q[:, lo:hi], k[:, lo:hi], (((1,), (1,)), ((), ())),
                preferred_element_type=f32))
        s_all = jnp.concatenate(s_list, axis=0)                   # (H*T, T)
        s_all = s_all - jnp.max(s_all, axis=-1, keepdims=True)
        p_all = jnp.exp(s_all)
        p_all = p_all * pl.reciprocal(jnp.sum(p_all, axis=-1, keepdims=True),
                                      approx=True)
        p_all = p_all.astype(bf16)

        attn = jnp.zeros((T, D), f32)
        for h in range(H):                                        # static head loop
            lo, hi = h * HD, (h + 1) * HD
            oh = jnp.dot(p_all[h * T:(h + 1) * T], v[:, lo:hi],
                         preferred_element_type=f32)              # (T, HD)
            # fold output projection per head (no lane concat; MRB-friendly on v7x)
            attn = attn + jnp.dot(oh.astype(bf16), wo[lo:hi, :],
                                  preferred_element_type=f32)
        tok = tok + attn + bo          # attention/residual dropouts: identity (eval)

        # ---- feed-forward block (pre-LN) ----
        xn2 = layer_norm(tok, ln2_g, ln2_b)
        h1 = jnp.dot(xn2.astype(bf16), w1, preferred_element_type=f32) + b1
        # tanh GELU routes through the EUP slot; tiny deviation from erf GELU.
        h1 = jax.nn.gelu(h1, approximate=True)
        h2 = jax.lax.dot_general(h1.astype(bf16), w2t, (((1,), (1,)), ((), ())),
                                 preferred_element_type=f32) + b2
        tok = tok + h2
        feats.append(tok)                                         # dict_features["L{l+1}"]

    # -------- final_layer_norm (prenorm) + classifier (dropout = id) --------
    xfin = layer_norm(tok, fin_g, fin_b)
    logits = jax.lax.dot_general(xfin.astype(bf16), out_wt,
                                 (((1,), (1,)), ((), ())),
                                 preferred_element_type=f32) + out_b

    # single lane-dense (T, 128) writeback: [L1 | L2 | logits | zero-pad]
    pad = jnp.zeros((T, _OUT_LANES - ENCODER_LAYERS * D - C), f32)
    out_ref[...] = jnp.concatenate(feats + [logits, pad], axis=-1)


# --------------------------- parameter init -------------------------------
def _xavier_normal(key, fan_in, fan_out, gain=1.0):
    std = gain * math.sqrt(2.0 / (fan_in + fan_out))
    # stored as (in, out) so the kernel computes x @ W (== torch x @ W.T)
    return (jax.random.normal(key, (fan_in, fan_out)) * std).astype(jnp.float32)


def init_tokengt_params(key):
    D, F, C = ENCODER_EMBED_DIM, ENCODER_FFN_EMBED_DIM, NUM_CLASSES
    K, NF, L = LAP_PE_K, NUM_NODE_FEATURES, ENCODER_LAYERS
    keys = iter(jax.random.split(key, 64))

    node_w = _xavier_normal(next(keys), NF, D)              # node_encoder (bias -> 0)
    lap_w = _xavier_normal(next(keys), 2 * K, D)            # lap_encoder (bias=False)
    order_emb = _xavier_normal(next(keys), 2, D)            # order_encoder.weight
    out_w = _xavier_normal(next(keys), D, C)                # embed_out (bias -> 0)

    # ---- small-f32 slab: tokenizer + head + per-layer LN/bias rows ----
    fvec = jnp.zeros((_FVEC_ROWS, _FVEC_LANES), jnp.float32)
    fvec = fvec.at[0:NF, 0:D].set(node_w)                                  # node_w
    fvec = fvec.at[NF:NF + K, 0:D].set(lap_w[0:K] + lap_w[K:2 * K])        # lap_wa+lap_wb
    fvec = fvec.at[_ROW_LAP_WA:_ROW_LAP_WA + K, 0:D].set(lap_w[0:K])       # lap_wa
    fvec = fvec.at[_ROW_LAP_WB:_ROW_LAP_WB + K, 0:D].set(lap_w[K:2 * K])   # lap_wb
    fvec = fvec.at[_ROW_MISC + 0, 0:D].set(order_emb[0])
    fvec = fvec.at[_ROW_MISC + 1, 0:D].set(order_emb[1])
    # _ROW_MISC+2: node_encoder bias (zero); +4: final-LN beta (zero); +5: out_b (zero)
    fvec = fvec.at[_ROW_MISC + 3, 0:D].set(1.0)                            # final-LN gamma
    fvec = fvec.at[_ROW_OUT_WT:_ROW_OUT_WT + C, 0:D].set(out_w.T)          # (C, D)

    # ---- per-layer bf16 weight slab: [Wq | Wk | Wv | Wo | W1 | W2^T] ----
    qkv_gain = 1.0 / math.sqrt(2.0)
    lw = jnp.zeros((L, D, 4 * D + 2 * F), jnp.float32)
    for l in range(L):
        wq = _xavier_normal(next(keys), D, D, qkv_gain)
        wk = _xavier_normal(next(keys), D, D, qkv_gain)
        wv = _xavier_normal(next(keys), D, D, qkv_gain)
        wo = _xavier_normal(next(keys), D, D)
        w1 = _xavier_normal(next(keys), D, F)
        w2 = _xavier_normal(next(keys), F, D)
        lw = lw.at[l, :, 0:D].set(wq)
        lw = lw.at[l, :, D:2 * D].set(wk)
        lw = lw.at[l, :, 2 * D:3 * D].set(wv)
        lw = lw.at[l, :, 3 * D:4 * D].set(wo)
        lw = lw.at[l, :, 4 * D:4 * D + F].set(w1)
        lw = lw.at[l, :, 4 * D + F:4 * D + 2 * F].set(w2.T)
        # LN gammas -> 1 (betas and all linear biases stay zero-init)
        fvec = fvec.at[_ROW_LVEC + 8 * l + 0, 0:D].set(1.0)    # ln1 gamma
        fvec = fvec.at[_ROW_LVEC + 8 * l + 4, 0:D].set(1.0)    # ln2 gamma

    return {"fvec": fvec,                                      # (56, 96)       f32
            "layer_w": lw.astype(jnp.bfloat16)}                # (L, 32, 256)   bf16


# ------------------------------ forward -----------------------------------
def tokengt_forward(params, x, edge_index, lap_eigvec):
    """TokenGTNet.forward. Accepts a single graph (x: (N,NF), edge_index: (2,E),
    lap_eigvec: (N,K)) or a batch of same-shape graphs with a leading G axis."""
    squeeze = x.ndim == 2
    if squeeze:
        x, edge_index, lap_eigvec = x[None], edge_index[None], lap_eigvec[None]

    G, n_nodes, _ = x.shape
    n_edges = edge_index.shape[-1]
    T = n_nodes + n_edges
    D, C = ENCODER_EMBED_DIM, NUM_CLASSES

    # input_dropout / classifier_dropout: identity in eval mode.
    # Host-side packing: ONE per-graph f32 slab (single input DMA per graph):
    #   rows [0, N)   : [x | lap_eigvec]
    #   rows [N, N+E) : [src, dst, 0...]  (indices exact in f32)
    node_rows = jnp.concatenate([x, lap_eigvec], axis=-1).astype(jnp.float32)
    ei_f = jnp.swapaxes(edge_index, 1, 2).astype(jnp.float32)            # (G, E, 2)
    edge_rows = jnp.pad(ei_f, ((0, 0), (0, 0), (0, node_rows.shape[-1] - 2)))
    graph_data = jnp.concatenate([node_rows, edge_rows], axis=1)         # (G, T, NF+K)

    kernel = functools.partial(_tokengt_fwd_kernel,
                               n_nodes=n_nodes, n_edges=n_edges)
    packed = pl.pallas_call(
        kernel,
        out_shape=jax.ShapeDtypeStruct((G, T, _OUT_LANES), jnp.float32),
        grid=(G,),
        in_specs=[
            # per-graph data block; weights map to block 0 (DMA'd once).
            pl.BlockSpec((None, T, graph_data.shape[-1]), lambda g: (g, 0, 0)),
            pl.BlockSpec((_FVEC_ROWS, _FVEC_LANES), lambda g: (0, 0)),
            pl.BlockSpec(params["layer_w"].shape, lambda g: (0, 0, 0)),
        ],
        out_specs=pl.BlockSpec((None, T, _OUT_LANES), lambda g: (g, 0, 0)),
        compiler_params=pltpu.CompilerParams(
            dimension_semantics=("parallel",)),          # both TCs on v7x
    )(graph_data, params["fvec"], params["layer_w"])

    feats = {"L{}".format(l + 1): packed[..., l * D:(l + 1) * D]
             for l in range(ENCODER_LAYERS)}
    feats["logits"] = packed[..., ENCODER_LAYERS * D:ENCODER_LAYERS * D + C]
    if squeeze:
        feats = {k: v[0] for k, v in feats.items()}
    return feats


# -------------------------------- main -------------------------------------
if __name__ == "__main__":
    key = jax.random.PRNGKey(0)
    k_param, k_x, k_ei, k_lap = jax.random.split(key, 4)

    params = init_tokengt_params(k_param)

    G = N_GRAPHS
    x = jax.random.normal(k_x, (G, N_NODES, NUM_NODE_FEATURES), jnp.float32)
    edge_index = jax.random.randint(k_ei, (G, 2, N_EDGES), 0, N_NODES, jnp.int32)
    lap_eigvec = jax.random.normal(k_lap, (G, N_NODES, LAP_PE_K), jnp.float32)

    fwd = jax.jit(tokengt_forward)
    out = fwd(params, x, edge_index, lap_eigvec)
    jax.block_until_ready(out["logits"])

    T = N_NODES + N_EDGES
    assert out["logits"].shape == (G, T, NUM_CLASSES)
    assert out["L1"].shape == (G, T, ENCODER_EMBED_DIM)
    assert out["L2"].shape == (G, T, ENCODER_EMBED_DIM)

    # single-graph path (module-identical interface) also works
    out1 = jax.jit(tokengt_forward)(params, x[0], edge_index[0], lap_eigvec[0])
    jax.block_until_ready(out1["logits"])
    assert out1["logits"].shape == (T, NUM_CLASSES)

    print("KERNEL_OK")
</pallas_src>

<mosaic_0001>
module attributes {stable_mosaic.version = 11 : i64} {
  func.func @_tokengt_fwd_kernel(%arg0: i32, %arg1: memref<1x24x8xf32, #tpu.memory_space<vmem>>, %arg2: memref<56x96xf32, #tpu.memory_space<vmem>>, %arg3: memref<2x32x256xbf16, #tpu.memory_space<vmem>>, %arg4: memref<1x24x128xf32, #tpu.memory_space<vmem>>) attributes {dimension_semantics = [#tpu.dimension_semantics<parallel>], iteration_bounds = array<i64: 4>, scalar_prefetch = 0 : i64, scratch_operands = 0 : i64, tpu.core_type = #tpu.core_type<tc>, window_params = [{transform_indices = @transform_0, window_bounds = array<i64: 1, 24, 8>}, {pipeline_mode = #tpu.pipeline_mode<synchronous>, transform_indices = @transform_1, window_bounds = array<i64: 56, 96>}, {pipeline_mode = #tpu.pipeline_mode<synchronous>, transform_indices = @transform_2, window_bounds = array<i64: 2, 32, 256>}, {transform_indices = @transform_3, window_bounds = array<i64: 1, 24, 128>}]} {
    %c0 = arith.constant 0 : index
    %c0_0 = arith.constant 0 : index
    %0 = vector.load %arg2[%c0, %c0_0] : memref<56x96xf32, #tpu.memory_space<vmem>>, vector<56x96xf32>
    %1 = vector.extract_strided_slice %0 {offsets = [0, 0], sizes = [8, 32], strides = [1, 1]} : vector<56x96xf32> to vector<8x32xf32>
    %2 = arith.truncf %1 : vector<8x32xf32> to vector<8x32xbf16>
    %3 = vector.extract_strided_slice %0 {offsets = [8, 0], sizes = [4, 32], strides = [1, 1]} : vector<56x96xf32> to vector<4x32xf32>
    %4 = arith.truncf %3 : vector<4x32xf32> to vector<4x32xbf16>
    %5 = vector.extract_strided_slice %0 {offsets = [16, 0], sizes = [4, 32], strides = [1, 1]} : vector<56x96xf32> to vector<4x32xf32>
    %6 = arith.truncf %5 : vector<4x32xf32> to vector<4x32xbf16>
    %7 = vector.extract_strided_slice %0 {offsets = [24, 0], sizes = [1, 32], strides = [1, 1]} : vector<56x96xf32> to vector<1x32xf32>
    %8 = vector.extract_strided_slice %0 {offsets = [25, 0], sizes = [1, 32], strides = [1, 1]} : vector<56x96xf32> to vector<1x32xf32>
    %9 = vector.extract_strided_slice %0 {offsets = [26, 0], sizes = [1, 32], strides = [1, 1]} : vector<56x96xf32> to vector<1x32xf32>
    %10 = vector.extract_strided_slice %0 {offsets = [27, 0], sizes = [1, 32], strides = [1, 1]} : vector<56x96xf32> to vector<1x32xf32>
    %11 = vector.extract_strided_slice %0 {offsets = [28, 0], sizes = [1, 32], strides = [1, 1]} : vector<56x96xf32> to vector<1x32xf32>
    %12 = vector.extract_strided_slice %0 {offsets = [29, 0], sizes = [1, 4], strides = [1, 1]} : vector<56x96xf32> to vector<1x4xf32>
    %13 = vector.extract_strided_slice %0 {offsets = [32, 0], sizes = [4, 32], strides = [1, 1]} : vector<56x96xf32> to vector<4x32xf32>
    %14 = arith.truncf %13 : vector<4x32xf32> to vector<4x32xbf16>
    %c0_1 = arith.constant 0 : index
    %c0_2 = arith.constant 0 : index
    %c0_3 = arith.constant 0 : index
    %15 = vector.load %arg1[%c0_1, %c0_2, %c0_3] : memref<1x24x8xf32, #tpu.memory_space<vmem>>, vector<1x24x8xf32>
    %16 = vector.shape_cast %15 : vector<1x24x8xf32> to vector<24x8xf32>
    %17 = vector.extract_strided_slice %16 {offsets = [0, 0], sizes = [8, 8], strides = [1, 1]} : vector<24x8xf32> to vector<8x8xf32>
    %18 = arith.truncf %17 : vector<8x8xf32> to vector<8x8xbf16>
    %19 = vector.extract_strided_slice %16 {offsets = [0, 4], sizes = [8, 4], strides = [1, 1]} : vector<24x8xf32> to vector<8x4xf32>
    %20 = arith.truncf %19 : vector<8x4xf32> to vector<8x4xbf16>
    %21 = vector.extract_strided_slice %16 {offsets = [8, 0], sizes = [16, 1], strides = [1, 1]} : vector<24x8xf32> to vector<16x1xf32>
    %22 = arith.fptosi %21 : vector<16x1xf32> to vector<16x1xi32>
    %23 = vector.extract_strided_slice %16 {offsets = [8, 1], sizes = [16, 1], strides = [1, 1]} : vector<24x8xf32> to vector<16x1xf32>
    %24 = arith.fptosi %23 : vector<16x1xf32> to vector<16x1xi32>
    %cst = arith.constant dense<0.000000e+00> : vector<8x32xf32>
    %25 = tpu.matmul %18, %2, %cst {dimension_numbers = #tpu.dot_dimension_numbers<[1], [0], [0], [1], [0, 0, 1, 1], [], []>} : vector<8x8xbf16>, vector<8x32xbf16>, vector<8x32xf32> -> vector<8x32xf32>
    %26 = vector.broadcast %9 : vector<1x32xf32> to vector<8x32xf32>
    %27 = arith.addf %25, %26 : vector<8x32xf32>
    %28 = vector.broadcast %8 : vector<1x32xf32> to vector<8x32xf32>
    %29 = arith.addf %27, %28 : vector<8x32xf32>
    %cst_4 = arith.constant dense<0.000000e+00> : vector<8x32xf32>
    %30 = tpu.matmul %20, %4, %cst_4 {dimension_numbers = #tpu.dot_dimension_numbers<[1], [0], [0], [1], [0, 0, 1, 1], [], []>} : vector<8x4xbf16>, vector<4x32xbf16>, vector<8x32xf32> -> vector<8x32xf32>
    %cst_5 = arith.constant dense<0.000000e+00> : vector<8x32xf32>
    %31 = tpu.matmul %20, %6, %cst_5 {dimension_numbers = #tpu.dot_dimension_numbers<[1], [0], [0], [1], [0, 0, 1, 1], [], []>} : vector<8x4xbf16>, vector<4x32xbf16>, vector<8x32xf32> -> vector<8x32xf32>
    %32 = tpu.concatenate %30, %31 in 0 : vector<8x32xf32>, vector<8x32xf32> -> vector<16x32xf32>
    %33 = arith.truncf %32 : vector<16x32xf32> to vector<16x32xbf16>
    %34 = tpu.iota {dimensions = array<i32: 1>} : vector<16x16xi32>
    %35 = vector.broadcast %22 : vector<16x1xi32> to vector<16x16xi32>
    %36 = arith.cmpi eq, %34, %35 : vector<16x16xi32>
    %c8_i32 = arith.constant 8 : i32
    %37 = vector.broadcast %c8_i32 : i32 to vector<16x16xi32>
    %38 = arith.subi %34, %37 : vector<16x16xi32>
    %39 = vector.broadcast %24 : vector<16x1xi32> to vector<16x16xi32>
    %40 = arith.cmpi eq, %38, %39 : vector<16x16xi32>
    %41 = arith.ori %36, %40 : vector<16x16xi1>
    %42 = arith.extui %41 : vector<16x16xi1> to vector<16x16xi32>
    %43 = arith.sitofp %42 : vector<16x16xi32> to vector<16x16xf32>
    %44 = arith.truncf %43 : vector<16x16xf32> to vector<16x16xbf16>
    %cst_6 = arith.constant dense<0.000000e+00> : vector<16x32xf32>
    %45 = tpu.matmul %44, %33, %cst_6 {dimension_numbers = #tpu.dot_dimension_numbers<[1], [0], [0], [1], [0, 0, 1, 1], [], []>} : vector<16x16xbf16>, vector<16x32xbf16>, vector<16x32xf32> -> vector<16x32xf32>
    %46 = arith.cmpi eq, %22, %24 : vector<16x1xi32>
    %47 = arith.extui %46 : vector<16x1xi1> to vector<16x1xi32>
    %48 = arith.sitofp %47 : vector<16x1xi32> to vector<16x1xf32>
    %49 = vector.broadcast %7 : vector<1x32xf32> to vector<16x32xf32>
    %50 = arith.addf %45, %49 : vector<16x32xf32>
    %51 = arith.subf %8, %7 : vector<1x32xf32>
    %52 = vector.broadcast %48 : vector<16x1xf32> to vector<16x32xf32>
    %53 = vector.broadcast %51 : vector<1x32xf32> to vector<16x32xf32>
    %54 = arith.mulf %52, %53 : vector<16x32xf32>
    %55 = arith.addf %50, %54 : vector<16x32xf32>
    %56 = tpu.concatenate %29, %55 in 0 : vector<8x32xf32>, vector<16x32xf32> -> vector<24x32xf32>
    %c0_7 = arith.constant 0 : index
    %c0_8 = arith.constant 0 : index
    %c0_9 = arith.constant 0 : index
    %57 = vector.load %arg3[%c0_7, %c0_8, %c0_9] : memref<2x32x256xbf16, #tpu.memory_space<vmem>>, vector<1x32x256xbf16>
    %58 = vector.shape_cast %57 : vector<1x32x256xbf16> to vector<32x256xbf16>
    %59 = vector.extract_strided_slice %58 {offsets = [0, 0], sizes = [32, 96], strides = [1, 1]} : vector<32x256xbf16> to vector<32x96xbf16>
    %60 = vector.extract_strided_slice %58 {offsets = [0, 96], sizes = [32, 32], strides = [1, 1]} : vector<32x256xbf16> to vector<32x32xbf16>
    %61 = vector.extract_strided_slice %58 {offsets = [0, 128], sizes = [32, 64], strides = [1, 1]} : vector<32x256xbf16> to vector<32x64xbf16>
    %62 = vector.extract_strided_slice %58 {offsets = [0, 192], sizes = [32, 64], strides = [1, 1]} : vector<32x256xbf16> to vector<32x64xbf16>
    %63 = vector.extract_strided_slice %0 {offsets = [40, 0], sizes = [8, 96], strides = [1, 1]} : vector<56x96xf32> to vector<8x96xf32>
    %64 = vector.extract_strided_slice %63 {offsets = [0, 0], sizes = [1, 32], strides = [1, 1]} : vector<8x96xf32> to vector<1x32xf32>
    %65 = vector.extract_strided_slice %63 {offsets = [1, 0], sizes = [1, 32], strides = [1, 1]} : vector<8x96xf32> to vector<1x32xf32>
    %66 = vector.extract_strided_slice %63 {offsets = [2, 0], sizes = [1, 96], strides = [1, 1]} : vector<8x96xf32> to vector<1x96xf32>
    %67 = vector.extract_strided_slice %63 {offsets = [3, 0], sizes = [1, 32], strides = [1, 1]} : vector<8x96xf32> to vector<1x32xf32>
    %68 = vector.extract_strided_slice %63 {offsets = [4, 0], sizes = [1, 32], strides = [1, 1]} : vector<8x96xf32> to vector<1x32xf32>
    %69 = vector.extract_strided_slice %63 {offsets = [5, 0], sizes = [1, 32], strides = [1, 1]} : vector<8x96xf32> to vector<1x32xf32>
    %70 = vector.extract_strided_slice %63 {offsets = [6, 0], sizes = [1, 64], strides = [1, 1]} : vector<8x96xf32> to vector<1x64xf32>
    %71 = vector.extract_strided_slice %63 {offsets = [7, 0], sizes = [1, 32], strides = [1, 1]} : vector<8x96xf32> to vector<1x32xf32>
    %cst_10 = arith.constant dense<0.000000e+00> : vector<24xf32>
    %72 = vector.multi_reduction <add>, %56, %cst_10 [1] : vector<24x32xf32> to vector<24xf32>
    %73 = vector.shape_cast %72 : vector<24xf32> to vector<24x1xf32>
    %cst_11 = arith.constant 3.200000e+01 : f32
    %74 = vector.broadcast %cst_11 : f32 to vector<24x1xf32>
    %75 = arith.divf %73, %74 : vector<24x1xf32>
    %76 = arith.mulf %56, %56 : vector<24x32xf32>
    %cst_12 = arith.constant dense<0.000000e+00> : vector<24xf32>
    %77 = vector.multi_reduction <add>, %76, %cst_12 [1] : vector<24x32xf32> to vector<24xf32>
    %78 = vector.shape_cast %77 : vector<24xf32> to vector<24x1xf32>
    %cst_13 = arith.constant 3.200000e+01 : f32
    %79 = vector.broadcast %cst_13 : f32 to vector<24x1xf32>
    %80 = arith.divf %78, %79 : vector<24x1xf32>
    %81 = arith.mulf %75, %75 : vector<24x1xf32>
    %82 = arith.subf %80, %81 : vector<24x1xf32>
    %83 = vector.broadcast %75 : vector<24x1xf32> to vector<24x32xf32>
    %84 = arith.subf %56, %83 : vector<24x32xf32>
    %cst_14 = arith.constant 9.99999974E-6 : f32
    %85 = vector.broadcast %cst_14 : f32 to vector<24x1xf32>
    %86 = arith.addf %82, %85 : vector<24x1xf32>
    %87 = math.rsqrt %86 : vector<24x1xf32>
    %88 = vector.broadcast %87 : vector<24x1xf32> to vector<24x32xf32>
    %89 = arith.mulf %84, %88 : vector<24x32xf32>
    %90 = vector.broadcast %64 : vector<1x32xf32> to vector<24x32xf32>
    %91 = arith.mulf %89, %90 : vector<24x32xf32>
    %92 = vector.broadcast %65 : vector<1x32xf32> to vector<24x32xf32>
    %93 = arith.addf %91, %92 : vector<24x32xf32>
    %94 = arith.truncf %93 : vector<24x32xf32> to vector<24x32xbf16>
    %cst_15 = arith.constant dense<0.000000e+00> : vector<24x96xf32>
    %95 = tpu.matmul %94, %59, %cst_15 {dimension_numbers = #tpu.dot_dimension_numbers<[1], [0], [0], [1], [0, 0, 1, 1], [], []>} : vector<24x32xbf16>, vector<32x96xbf16>, vector<24x96xf32> -> vector<24x96xf32>
    %96 = vector.broadcast %66 : vector<1x96xf32> to vector<24x96xf32>
    %97 = arith.addf %95, %96 : vector<24x96xf32>
    %98 = vector.extract_strided_slice %97 {offsets = [0, 0], sizes = [24, 32], strides = [1, 1]} : vector<24x96xf32> to vector<24x32xf32>
    %cst_16 = arith.constant 0.353553385 : f32
    %99 = vector.broadcast %cst_16 : f32 to vector<24x32xf32>
    %100 = arith.mulf %98, %99 : vector<24x32xf32>
    %101 = arith.truncf %100 : vector<24x32xf32> to vector<24x32xbf16>
    %102 = vector.extract_strided_slice %97 {offsets = [0, 32], sizes = [24, 32], strides = [1, 1]} : vector<24x96xf32> to vector<24x32xf32>
    %103 = arith.truncf %102 : vector<24x32xf32> to vector<24x32xbf16>
    %104 = vector.extract_strided_slice %97 {offsets = [0, 64], sizes = [24, 32], strides = [1, 1]} : vector<24x96xf32> to vector<24x32xf32>
    %105 = arith.truncf %104 : vector<24x32xf32> to vector<24x32xbf16>
    %106 = vector.extract_strided_slice %101 {offsets = [0, 0], sizes = [24, 8], strides = [1, 1]} : vector<24x32xbf16> to vector<24x8xbf16>
    %107 = vector.extract_strided_slice %103 {offsets = [0, 0], sizes = [24, 8], strides = [1, 1]} : vector<24x32xbf16> to vector<24x8xbf16>
    %cst_17 = arith.constant dense<0.000000e+00> : vector<24x24xf32>
    %108 = tpu.matmul %106, %107, %cst_17 {dimension_numbers = #tpu.dot_dimension_numbers<[1], [1], [0], [0], [0, 0, 1, 0], [], []>} : vector<24x8xbf16>, vector<24x8xbf16>, vector<24x24xf32> -> vector<24x24xf32>
    %109 = vector.extract_strided_slice %101 {offsets = [0, 8], sizes = [24, 8], strides = [1, 1]} : vector<24x32xbf16> to vector<24x8xbf16>
    %110 = vector.extract_strided_slice %103 {offsets = [0, 8], sizes = [24, 8], strides = [1, 1]} : vector<24x32xbf16> to vector<24x8xbf16>
    %cst_18 = arith.constant dense<0.000000e+00> : vector<24x24xf32>
    %111 = tpu.matmul %109, %110, %cst_18 {dimension_numbers = #tpu.dot_dimension_numbers<[1], [1], [0], [0], [0, 0, 1, 0], [], []>} : vector<24x8xbf16>, vector<24x8xbf16>, vector<24x24xf32> -> vector<24x24xf32>
    %112 = vector.extract_strided_slice %101 {offsets = [0, 16], sizes = [24, 8], strides = [1, 1]} : vector<24x32xbf16> to vector<24x8xbf16>
    %113 = vector.extract_strided_slice %103 {offsets = [0, 16], sizes = [24, 8], strides = [1, 1]} : vector<24x32xbf16> to vector<24x8xbf16>
    %cst_19 = arith.constant dense<0.000000e+00> : vector<24x24xf32>
    %114 = tpu.matmul %112, %113, %cst_19 {dimension_numbers = #tpu.dot_dimension_numbers<[1], [1], [0], [0], [0, 0, 1, 0], [], []>} : vector<24x8xbf16>, vector<24x8xbf16>, vector<24x24xf32> -> vector<24x24xf32>
    %115 = vector.extract_strided_slice %101 {offsets = [0, 24], sizes = [24, 8], strides = [1, 1]} : vector<24x32xbf16> to vector<24x8xbf16>
    %116 = vector.extract_strided_slice %103 {offsets = [0, 24], sizes = [24, 8], strides = [1, 1]} : vector<24x32xbf16> to vector<24x8xbf16>
    %cst_20 = arith.constant dense<0.000000e+00> : vector<24x24xf32>
    %117 = tpu.matmul %115, %116, %cst_20 {dimension_numbers = #tpu.dot_dimension_numbers<[1], [1], [0], [0], [0, 0, 1, 0], [], []>} : vector<24x8xbf16>, vector<24x8xbf16>, vector<24x24xf32> -> vector<24x24xf32>
    %118 = tpu.concatenate %108, %111, %114, %117 in 0 : vector<24x24xf32>, vector<24x24xf32>, vector<24x24xf32>, vector<24x24xf32> -> vector<96x24xf32>
    %cst_21 = arith.constant dense<0xFF800000> : vector<96xf32>
    %119 = vector.multi_reduction <maximumf>, %118, %cst_21 [1] : vector<96x24xf32> to vector<96xf32>
    %120 = vector.shape_cast %119 : vector<96xf32> to vector<96x1xf32>
    %121 = vector.broadcast %120 : vector<96x1xf32> to vector<96x24xf32>
    %122 = arith.subf %118, %121 : vector<96x24xf32>
    %123 = math.exp %122 : vector<96x24xf32>
    %cst_22 = arith.constant dense<0.000000e+00> : vector<96xf32>
    %124 = vector.multi_reduction <add>, %123, %cst_22 [1] : vector<96x24xf32> to vector<96xf32>
    %125 = vector.shape_cast %124 : vector<96xf32> to vector<96x1xf32>
    %126 = tpu.reciprocal %125 {approx = true} : vector<96x1xf32> -> vector<96x1xf32>
    %127 = vector.broadcast %126 : vector<96x1xf32> to vector<96x24xf32>
    %128 = arith.mulf %123, %127 : vector<96x24xf32>
    %129 = arith.truncf %128 : vector<96x24xf32> to vector<96x24xbf16>
    %cst_23 = arith.constant 0.000000e+00 : f32
    %130 = vector.broadcast %cst_23 : f32 to vector<24x32xf32>
    %131 = vector.extract_strided_slice %129 {offsets = [0, 0], sizes = [24, 24], strides = [1, 1]} : vector<96x24xbf16> to vector<24x24xbf16>
    %132 = vector.extract_strided_slice %105 {offsets = [0, 0], sizes = [24, 8], strides = [1, 1]} : vector<24x32xbf16> to vector<24x8xbf16>
    %cst_24 = arith.constant dense<0.000000e+00> : vector<24x8xf32>
    %133 = tpu.matmul %131, %132, %cst_24 {dimension_numbers = #tpu.dot_dimension_numbers<[1], [0], [0], [1], [0, 0, 1, 1], [], []>} : vector<24x24xbf16>, vector<24x8xbf16>, vector<24x8xf32> -> vector<24x8xf32>
    %134 = arith.truncf %133 : vector<24x8xf32> to vector<24x8xbf16>
    %135 = vector.extract_strided_slice %60 {offsets = [0, 0], sizes = [8, 32], strides = [1, 1]} : vector<32x32xbf16> to vector<8x32xbf16>
    %cst_25 = arith.constant dense<0.000000e+00> : vector<24x32xf32>
    %136 = tpu.matmul %134, %135, %cst_25 {dimension_numbers = #tpu.dot_dimension_numbers<[1], [0], [0], [1], [0, 0, 1, 1], [], []>} : vector<24x8xbf16>, vector<8x32xbf16>, vector<24x32xf32> -> vector<24x32xf32>
    %137 = arith.addf %130, %136 : vector<24x32xf32>
    %138 = vector.extract_strided_slice %129 {offsets = [24, 0], sizes = [24, 24], strides = [1, 1]} : vector<96x24xbf16> to vector<24x24xbf16>
    %139 = vector.extract_strided_slice %105 {offsets = [0, 8], sizes = [24, 8], strides = [1, 1]} : vector<24x32xbf16> to vector<24x8xbf16>
    %cst_26 = arith.constant dense<0.000000e+00> : vector<24x8xf32>
    %140 = tpu.matmul %138, %139, %cst_26 {dimension_numbers = #tpu.dot_dimension_numbers<[1], [0], [0], [1], [0, 0, 1, 1], [], []>} : vector<24x24xbf16>, vector<24x8xbf16>, vector<24x8xf32> -> vector<24x8xf32>
    %141 = arith.truncf %140 : vector<24x8xf32> to vector<24x8xbf16>
    %142 = vector.extract_strided_slice %60 {offsets = [8, 0], sizes = [8, 32], strides = [1, 1]} : vector<32x32xbf16> to vector<8x32xbf16>
    %cst_27 = arith.constant dense<0.000000e+00> : vector<24x32xf32>
    %143 = tpu.matmul %141, %142, %cst_27 {dimension_numbers = #tpu.dot_dimension_numbers<[1], [0], [0], [1], [0, 0, 1, 1], [], []>} : vector<24x8xbf16>, vector<8x32xbf16>, vector<24x32xf32> -> vector<24x32xf32>
    %144 = arith.addf %137, %143 : vector<24x32xf32>
    %145 = vector.extract_strided_slice %129 {offsets = [48, 0], sizes = [24, 24], strides = [1, 1]} : vector<96x24xbf16> to vector<24x24xbf16>
    %146 = vector.extract_strided_slice %105 {offsets = [0, 16], sizes = [24, 8], strides = [1, 1]} : vector<24x32xbf16> to vector<24x8xbf16>
    %cst_28 = arith.constant dense<0.000000e+00> : vector<24x8xf32>
    %147 = tpu.matmul %145, %146, %cst_28 {dimension_numbers = #tpu.dot_dimension_numbers<[1], [0], [0], [1], [0, 0, 1, 1], [], []>} : vector<24x24xbf16>, vector<24x8xbf16>, vector<24x8xf32> -> vector<24x8xf32>
    %148 = arith.truncf %147 : vector<24x8xf32> to vector<24x8xbf16>
    %149 = vector.extract_strided_slice %60 {offsets = [16, 0], sizes = [8, 32], strides = [1, 1]} : vector<32x32xbf16> to vector<8x32xbf16>
    %cst_29 = arith.constant dense<0.000000e+00> : vector<24x32xf32>
    %150 = tpu.matmul %148, %149, %cst_29 {dimension_numbers = #tpu.dot_dimension_numbers<[1], [0], [0], [1], [0, 0, 1, 1], [], []>} : vector<24x8xbf16>, vector<8x32xbf16>, vector<24x32xf32> -> vector<24x32xf32>
    %151 = arith.addf %144, %150 : vector<24x32xf32>
    %152 = vector.extract_strided_slice %129 {offsets = [72, 0], sizes = [24, 24], strides = [1, 1]} : vector<96x24xbf16> to vector<24x24xbf16>
    %153 = vector.extract_strided_slice %105 {offsets = [0, 24], sizes = [24, 8], strides = [1, 1]} : vector<24x32xbf16> to vector<24x8xbf16>
    %cst_30 = arith.constant dense<0.000000e+00> : vector<24x8xf32>
    %154 = tpu.matmul %152, %153, %cst_30 {dimension_numbers = #tpu.dot_dimension_numbers<[1], [0], [0], [1], [0, 0, 1, 1], [], []>} : vector<24x24xbf16>, vector<24x8xbf16>, vector<24x8xf32> -> vector<24x8xf32>
    %155 = arith.truncf %154 : vector<24x8xf32> to vector<24x8xbf16>
    %156 = vector.extract_strided_slice %60 {offsets = [24, 0], sizes = [8, 32], strides = [1, 1]} : vector<32x32xbf16> to vector<8x32xbf16>
    %cst_31 = arith.constant dense<0.000000e+00> : vector<24x32xf32>
    %157 = tpu.matmul %155, %156, %cst_31 {dimension_numbers = #tpu.dot_dimension_numbers<[1], [0], [0], [1], [0, 0, 1, 1], [], []>} : vector<24x8xbf16>, vector<8x32xbf16>, vector<24x32xf32> -> vector<24x32xf32>
    %158 = arith.addf %151, %157 : vector<24x32xf32>
    %159 = arith.addf %56, %158 : vector<24x32xf32>
    %160 = vector.broadcast %67 : vector<1x32xf32> to vector<24x32xf32>
    %161 = arith.addf %159, %160 : vector<24x32xf32>
    %cst_32 = arith.constant dense<0.000000e+00> : vector<24xf32>
    %162 = vector.multi_reduction <add>, %161, %cst_32 [1] : vector<24x32xf32> to vector<24xf32>
    %163 = vector.shape_cast %162 : vector<24xf32> to vector<24x1xf32>
    %cst_33 = arith.constant 3.200000e+01 : f32
    %164 = vector.broadcast %cst_33 : f32 to vector<24x1xf32>
    %165 = arith.divf %163, %164 : vector<24x1xf32>
    %166 = arith.mulf %161, %161 : vector<24x32xf32>
    %cst_34 = arith.constant dense<0.000000e+00> : vector<24xf32>
    %167 = vector.multi_reduction <add>, %166, %cst_34 [1] : vector<24x32xf32> to vector<24xf32>
    %168 = vector.shape_cast %167 : vector<24xf32> to vector<24x1xf32>
    %cst_35 = arith.constant 3.200000e+01 : f32
    %169 = vector.broadcast %cst_35 : f32 to vector<24x1xf32>
    %170 = arith.divf %168, %169 : vector<24x1xf32>
    %171 = arith.mulf %165, %165 : vector<24x1xf32>
    %172 = arith.subf %170, %171 : vector<24x1xf32>
    %173 = vector.broadcast %165 : vector<24x1xf32> to vector<24x32xf32>
    %174 = arith.subf %161, %173 : vector<24x32xf32>
    %cst_36 = arith.constant 9.99999974E-6 : f32
    %175 = vector.broadcast %cst_36 : f32 to vector<24x1xf32>
    %176 = arith.addf %172, %175 : vector<24x1xf32>
    %177 = math.rsqrt %176 : vector<24x1xf32>
    %178 = vector.broadcast %177 : vector<24x1xf32> to vector<24x32xf32>
    %179 = arith.mulf %174, %178 : vector<24x32xf32>
    %180 = vector.broadcast %68 : vector<1x32xf32> to vector<24x32xf32>
    %181 = arith.mulf %179, %180 : vector<24x32xf32>
    %182 = vector.broadcast %69 : vector<1x32xf32> to vector<24x32xf32>
    %183 = arith.addf %181, %182 : vector<24x32xf32>
    %184 = arith.truncf %183 : vector<24x32xf32> to vector<24x32xbf16>
    %cst_37 = arith.constant dense<0.000000e+00> : vector<24x64xf32>
    %185 = tpu.matmul %184, %61, %cst_37 {dimension_numbers = #tpu.dot_dimension_numbers<[1], [0], [0], [1], [0, 0, 1, 1], [], []>} : vector<24x32xbf16>, vector<32x64xbf16>, vector<24x64xf32> -> vector<24x64xf32>
    %186 = vector.broadcast %70 : vector<1x64xf32> to vector<24x64xf32>
    %187 = arith.addf %185, %186 : vector<24x64xf32>
    %188 = arith.mulf %187, %187 : vector<24x64xf32>
    %189 = arith.mulf %187, %188 : vector<24x64xf32>
    %cst_38 = arith.constant 4.471500e-02 : f32
    %190 = vector.broadcast %cst_38 : f32 to vector<24x64xf32>
    %191 = arith.mulf %190, %189 : vector<24x64xf32>
    %192 = arith.addf %187, %191 : vector<24x64xf32>
    %cst_39 = arith.constant 0.797884583 : f32
    %193 = vector.broadcast %cst_39 : f32 to vector<24x64xf32>
    %194 = arith.mulf %193, %192 : vector<24x64xf32>
    %195 = math.tanh %194 : vector<24x64xf32>
    %cst_40 = arith.constant 1.000000e+00 : f32
    %196 = vector.broadcast %cst_40 : f32 to vector<24x64xf32>
    %197 = arith.addf %196, %195 : vector<24x64xf32>
    %cst_41 = arith.constant 5.000000e-01 : f32
    %198 = vector.broadcast %cst_41 : f32 to vector<24x64xf32>
    %199 = arith.mulf %198, %197 : vector<24x64xf32>
    %200 = arith.mulf %187, %199 : vector<24x64xf32>
    %201 = arith.truncf %200 : vector<24x64xf32> to vector<24x64xbf16>
    %cst_42 = arith.constant dense<0.000000e+00> : vector<24x32xf32>
    %202 = tpu.matmul %201, %62, %cst_42 {dimension_numbers = #tpu.dot_dimension_numbers<[1], [1], [0], [0], [0, 0, 1, 0], [], []>} : vector<24x64xbf16>, vector<32x64xbf16>, vector<24x32xf32> -> vector<24x32xf32>
    %203 = vector.broadcast %71 : vector<1x32xf32> to vector<24x32xf32>
    %204 = arith.addf %202, %203 : vector<24x32xf32>
    %205 = arith.addf %161, %204 : vector<24x32xf32>
    %c1 = arith.constant 1 : index
    %c0_43 = arith.constant 0 : index
    %c0_44 = arith.constant 0 : index
    %206 = vector.load %arg3[%c1, %c0_43, %c0_44] : memref<2x32x256xbf16, #tpu.memory_space<vmem>>, vector<1x32x256xbf16>
    %207 = vector.shape_cast %206 : vector<1x32x256xbf16> to vector<32x256xbf16>
    %208 = vector.extract_strided_slice %207 {offsets = [0, 0], sizes = [32, 96], strides = [1, 1]} : vector<32x256xbf16> to vector<32x96xbf16>
    %209 = vector.extract_strided_slice %207 {offsets = [0, 96], sizes = [32, 32], strides = [1, 1]} : vector<32x256xbf16> to vector<32x32xbf16>
    %210 = vector.extract_strided_slice %207 {offsets = [0, 128], sizes = [32, 64], strides = [1, 1]} : vector<32x256xbf16> to vector<32x64xbf16>
    %211 = vector.extract_strided_slice %207 {offsets = [0, 192], sizes = [32, 64], strides = [1, 1]} : vector<32x256xbf16> to vector<32x64xbf16>
    %212 = vector.extract_strided_slice %0 {offsets = [48, 0], sizes = [8, 96], strides = [1, 1]} : vector<56x96xf32> to vector<8x96xf32>
    %213 = vector.extract_strided_slice %212 {offsets = [0, 0], sizes = [1, 32], strides = [1, 1]} : vector<8x96xf32> to vector<1x32xf32>
    %214 = vector.extract_strided_slice %212 {offsets = [1, 0], sizes = [1, 32], strides = [1, 1]} : vector<8x96xf32> to vector<1x32xf32>
    %215 = vector.extract_strided_slice %212 {offsets = [2, 0], sizes = [1, 96], strides = [1, 1]} : vector<8x96xf32> to vector<1x96xf32>
    %216 = vector.extract_strided_slice %212 {offsets = [3, 0], sizes = [1, 32], strides = [1, 1]} : vector<8x96xf32> to vector<1x32xf32>
    %217 = vector.extract_strided_slice %212 {offsets = [4, 0], sizes = [1, 32], strides = [1, 1]} : vector<8x96xf32> to vector<1x32xf32>
    %218 = vector.extract_strided_slice %212 {offsets = [5, 0], sizes = [1, 32], strides = [1, 1]} : vector<8x96xf32> to vector<1x32xf32>
    %219 = vector.extract_strided_slice %212 {offsets = [6, 0], sizes = [1, 64], strides = [1, 1]} : vector<8x96xf32> to vector<1x64xf32>
    %220 = vector.extract_strided_slice %212 {offsets = [7, 0], sizes = [1, 32], strides = [1, 1]} : vector<8x96xf32> to vector<1x32xf32>
    %cst_45 = arith.constant dense<0.000000e+00> : vector<24xf32>
    %221 = vector.multi_reduction <add>, %205, %cst_45 [1] : vector<24x32xf32> to vector<24xf32>
    %222 = vector.shape_cast %221 : vector<24xf32> to vector<24x1xf32>
    %cst_46 = arith.constant 3.200000e+01 : f32
    %223 = vector.broadcast %cst_46 : f32 to vector<24x1xf32>
    %224 = arith.divf %222, %223 : vector<24x1xf32>
    %225 = arith.mulf %205, %205 : vector<24x32xf32>
    %cst_47 = arith.constant dense<0.000000e+00> : vector<24xf32>
    %226 = vector.multi_reduction <add>, %225, %cst_47 [1] : vector<24x32xf32> to vector<24xf32>
    %227 = vector.shape_cast %226 : vector<24xf32> to vector<24x1xf32>
    %cst_48 = arith.constant 3.200000e+01 : f32
    %228 = vector.broadcast %cst_48 : f32 to vector<24x1xf32>
    %229 = arith.divf %227, %228 : vector<24x1xf32>
    %230 = arith.mulf %224, %224 : vector<24x1xf32>
    %231 = arith.subf %229, %230 : vector<24x1xf32>
    %232 = vector.broadcast %224 : vector<24x1xf32> to vector<24x32xf32>
    %233 = arith.subf %205, %232 : vector<24x32xf32>
    %cst_49 = arith.constant 9.99999974E-6 : f32
    %234 = vector.broadcast %cst_49 : f32 to vector<24x1xf32>
    %235 = arith.addf %231, %234 : vector<24x1xf32>
    %236 = math.rsqrt %235 : vector<24x1xf32>
    %237 = vector.broadcast %236 : vector<24x1xf32> to vector<24x32xf32>
    %238 = arith.mulf %233, %237 : vector<24x32xf32>
    %239 = vector.broadcast %213 : vector<1x32xf32> to vector<24x32xf32>
    %240 = arith.mulf %238, %239 : vector<24x32xf32>
    %241 = vector.broadcast %214 : vector<1x32xf32> to vector<24x32xf32>
    %242 = arith.addf %240, %241 : vector<24x32xf32>
    %243 = arith.truncf %242 : vector<24x32xf32> to vector<24x32xbf16>
    %cst_50 = arith.constant dense<0.000000e+00> : vector<24x96xf32>
    %244 = tpu.matmul %243, %208, %cst_50 {dimension_numbers = #tpu.dot_dimension_numbers<[1], [0], [0], [1], [0, 0, 1, 1], [], []>} : vector<24x32xbf16>, vector<32x96xbf16>, vector<24x96xf32> -> vector<24x96xf32>
    %245 = vector.broadcast %215 : vector<1x96xf32> to vector<24x96xf32>
    %246 = arith.addf %244, %245 : vector<24x96xf32>
    %247 = vector.extract_strided_slice %246 {offsets = [0, 0], sizes = [24, 32], strides = [1, 1]} : vector<24x96xf32> to vector<24x32xf32>
    %cst_51 = arith.constant 0.353553385 : f32
    %248 = vector.broadcast %cst_51 : f32 to vector<24x32xf32>
    %249 = arith.mulf %247, %248 : vector<24x32xf32>
    %250 = arith.truncf %249 : vector<24x32xf32> to vector<24x32xbf16>
    %251 = vector.extract_strided_slice %246 {offsets = [0, 32], sizes = [24, 32], strides = [1, 1]} : vector<24x96xf32> to vector<24x32xf32>
    %252 = arith.truncf %251 : vector<24x32xf32> to vector<24x32xbf16>
    %253 = vector.extract_strided_slice %246 {offsets = [0, 64], sizes = [24, 32], strides = [1, 1]} : vector<24x96xf32> to vector<24x32xf32>
    %254 = arith.truncf %253 : vector<24x32xf32> to vector<24x32xbf16>
    %255 = vector.extract_strided_slice %250 {offsets = [0, 0], sizes = [24, 8], strides = [1, 1]} : vector<24x32xbf16> to vector<24x8xbf16>
    %256 = vector.extract_strided_slice %252 {offsets = [0, 0], sizes = [24, 8], strides = [1, 1]} : vector<24x32xbf16> to vector<24x8xbf16>
    %cst_52 = arith.constant dense<0.000000e+00> : vector<24x24xf32>
    %257 = tpu.matmul %255, %256, %cst_52 {dimension_numbers = #tpu.dot_dimension_numbers<[1], [1], [0], [0], [0, 0, 1, 0], [], []>} : vector<24x8xbf16>, vector<24x8xbf16>, vector<24x24xf32> -> vector<24x24xf32>
    %258 = vector.extract_strided_slice %250 {offsets = [0, 8], sizes = [24, 8], strides = [1, 1]} : vector<24x32xbf16> to vector<24x8xbf16>
    %259 = vector.extract_strided_slice %252 {offsets = [0, 8], sizes = [24, 8], strides = [1, 1]} : vector<24x32xbf16> to vector<24x8xbf16>
    %cst_53 = arith.constant dense<0.000000e+00> : vector<24x24xf32>
    %260 = tpu.matmul %258, %259, %cst_53 {dimension_numbers = #tpu.dot_dimension_numbers<[1], [1], [0], [0], [0, 0, 1, 0], [], []>} : vector<24x8xbf16>, vector<24x8xbf16>, vector<24x24xf32> -> vector<24x24xf32>
    %261 = vector.extract_strided_slice %250 {offsets = [0, 16], sizes = [24, 8], strides = [1, 1]} : vector<24x32xbf16> to vector<24x8xbf16>
    %262 = vector.extract_strided_slice %252 {offsets = [0, 16], sizes = [24, 8], strides = [1, 1]} : vector<24x32xbf16> to vector<24x8xbf16>
    %cst_54 = arith.constant dense<0.000000e+00> : vector<24x24xf32>
    %263 = tpu.matmul %261, %262, %cst_54 {dimension_numbers = #tpu.dot_dimension_numbers<[1], [1], [0], [0], [0, 0, 1, 0], [], []>} : vector<24x8xbf16>, vector<24x8xbf16>, vector<24x24xf32> -> vector<24x24xf32>
    %264 = vector.extract_strided_slice %250 {offsets = [0, 24], sizes = [24, 8], strides = [1, 1]} : vector<24x32xbf16> to vector<24x8xbf16>
    %265 = vector.extract_strided_slice %252 {offsets = [0, 24], sizes = [24, 8], strides = [1, 1]} : vector<24x32xbf16> to vector<24x8xbf16>
    %cst_55 = arith.constant dense<0.000000e+00> : vector<24x24xf32>
    %266 = tpu.matmul %264, %265, %cst_55 {dimension_numbers = #tpu.dot_dimension_numbers<[1], [1], [0], [0], [0, 0, 1, 0], [], []>} : vector<24x8xbf16>, vector<24x8xbf16>, vector<24x24xf32> -> vector<24x24xf32>
    %267 = tpu.concatenate %257, %260, %263, %266 in 0 : vector<24x24xf32>, vector<24x24xf32>, vector<24x24xf32>, vector<24x24xf32> -> vector<96x24xf32>
    %cst_56 = arith.constant dense<0xFF800000> : vector<96xf32>
    %268 = vector.multi_reduction <maximumf>, %267, %cst_56 [1] : vector<96x24xf32> to vector<96xf32>
    %269 = vector.shape_cast %268 : vector<96xf32> to vector<96x1xf32>
    %270 = vector.broadcast %269 : vector<96x1xf32> to vector<96x24xf32>
    %271 = arith.subf %267, %270 : vector<96x24xf32>
    %272 = math.exp %271 : vector<96x24xf32>
    %cst_57 = arith.constant dense<0.000000e+00> : vector<96xf32>
    %273 = vector.multi_reduction <add>, %272, %cst_57 [1] : vector<96x24xf32> to vector<96xf32>
    %274 = vector.shape_cast %273 : vector<96xf32> to vector<96x1xf32>
    %275 = tpu.reciprocal %274 {approx = true} : vector<96x1xf32> -> vector<96x1xf32>
    %276 = vector.broadcast %275 : vector<96x1xf32> to vector<96x24xf32>
    %277 = arith.mulf %272, %276 : vector<96x24xf32>
    %278 = arith.truncf %277 : vector<96x24xf32> to vector<96x24xbf16>
    %cst_58 = arith.constant 0.000000e+00 : f32
    %279 = vector.broadcast %cst_58 : f32 to vector<24x32xf32>
    %280 = vector.extract_strided_slice %278 {offsets = [0, 0], sizes = [24, 24], strides = [1, 1]} : vector<96x24xbf16> to vector<24x24xbf16>
    %281 = vector.extract_strided_slice %254 {offsets = [0, 0], sizes = [24, 8], strides = [1, 1]} : vector<24x32xbf16> to vector<24x8xbf16>
    %cst_59 = arith.constant dense<0.000000e+00> : vector<24x8xf32>
    %282 = tpu.matmul %280, %281, %cst_59 {dimension_numbers = #tpu.dot_dimension_numbers<[1], [0], [0], [1], [0, 0, 1, 1], [], []>} : vector<24x24xbf16>, vector<24x8xbf16>, vector<24x8xf32> -> vector<24x8xf32>
    %283 = arith.truncf %282 : vector<24x8xf32> to vector<24x8xbf16>
    %284 = vector.extract_strided_slice %209 {offsets = [0, 0], sizes = [8, 32], strides = [1, 1]} : vector<32x32xbf16> to vector<8x32xbf16>
    %cst_60 = arith.constant dense<0.000000e+00> : vector<24x32xf32>
    %285 = tpu.matmul %283, %284, %cst_60 {dimension_numbers = #tpu.dot_dimension_numbers<[1], [0], [0], [1], [0, 0, 1, 1], [], []>} : vector<24x8xbf16>, vector<8x32xbf16>, vector<24x32xf32> -> vector<24x32xf32>
    %286 = arith.addf %279, %285 : vector<24x32xf32>
    %287 = vector.extract_strided_slice %278 {offsets = [24, 0], sizes = [24, 24], strides = [1, 1]} : vector<96x24xbf16> to vector<24x24xbf16>
    %288 = vector.extract_strided_slice %254 {offsets = [0, 8], sizes = [24, 8], strides = [1, 1]} : vector<24x32xbf16> to vector<24x8xbf16>
    %cst_61 = arith.constant dense<0.000000e+00> : vector<24x8xf32>
    %289 = tpu.matmul %287, %288, %cst_61 {dimension_numbers = #tpu.dot_dimension_numbers<[1], [0], [0], [1], [0, 0, 1, 1], [], []>} : vector<24x24xbf16>, vector<24x8xbf16>, vector<24x8xf32> -> vector<24x8xf32>
    %290 = arith.truncf %289 : vector<24x8xf32> to vector<24x8xbf16>
    %291 = vector.extract_strided_slice %209 {offsets = [8, 0], sizes = [8, 32], strides = [1, 1]} : vector<32x32xbf16> to vector<8x32xbf16>
    %cst_62 = arith.constant dense<0.000000e+00> : vector<24x32xf32>
    %292 = tpu.matmul %290, %291, %cst_62 {dimension_numbers = #tpu.dot_dimension_numbers<[1], [0], [0], [1], [0, 0, 1, 1], [], []>} : vector<24x8xbf16>, vector<8x32xbf16>, vector<24x32xf32> -> vector<24x32xf32>
    %293 = arith.addf %286, %292 : vector<24x32xf32>
    %294 = vector.extract_strided_slice %278 {offsets = [48, 0], sizes = [24, 24], strides = [1, 1]} : vector<96x24xbf16> to vector<24x24xbf16>
    %295 = vector.extract_strided_slice %254 {offsets = [0, 16], sizes = [24, 8], strides = [1, 1]} : vector<24x32xbf16> to vector<24x8xbf16>
    %cst_63 = arith.constant dense<0.000000e+00> : vector<24x8xf32>
    %296 = tpu.matmul %294, %295, %cst_63 {dimension_numbers = #tpu.dot_dimension_numbers<[1], [0], [0], [1], [0, 0, 1, 1], [], []>} : vector<24x24xbf16>, vector<24x8xbf16>, vector<24x8xf32> -> vector<24x8xf32>
    %297 = arith.truncf %296 : vector<24x8xf32> to vector<24x8xbf16>
    %298 = vector.extract_strided_slice %209 {offsets = [16, 0], sizes = [8, 32], strides = [1, 1]} : vector<32x32xbf16> to vector<8x32xbf16>
    %cst_64 = arith.constant dense<0.000000e+00> : vector<24x32xf32>
    %299 = tpu.matmul %297, %298, %cst_64 {dimension_numbers = #tpu.dot_dimension_numbers<[1], [0], [0], [1], [0, 0, 1, 1], [], []>} : vector<24x8xbf16>, vector<8x32xbf16>, vector<24x32xf32> -> vector<24x32xf32>
    %300 = arith.addf %293, %299 : vector<24x32xf32>
    %301 = vector.extract_strided_slice %278 {offsets = [72, 0], sizes = [24, 24], strides = [1, 1]} : vector<96x24xbf16> to vector<24x24xbf16>
    %302 = vector.extract_strided_slice %254 {offsets = [0, 24], sizes = [24, 8], strides = [1, 1]} : vector<24x32xbf16> to vector<24x8xbf16>
    %cst_65 = arith.constant dense<0.000000e+00> : vector<24x8xf32>
    %303 = tpu.matmul %301, %302, %cst_65 {dimension_numbers = #tpu.dot_dimension_numbers<[1], [0], [0], [1], [0, 0, 1, 1], [], []>} : vector<24x24xbf16>, vector<24x8xbf16>, vector<24x8xf32> -> vector<24x8xf32>
    %304 = arith.truncf %303 : vector<24x8xf32> to vector<24x8xbf16>
    %305 = vector.extract_strided_slice %209 {offsets = [24, 0], sizes = [8, 32], strides = [1, 1]} : vector<32x32xbf16> to vector<8x32xbf16>
    %cst_66 = arith.constant dense<0.000000e+00> : vector<24x32xf32>
    %306 = tpu.matmul %304, %305, %cst_66 {dimension_numbers = #tpu.dot_dimension_numbers<[1], [0], [0], [1], [0, 0, 1, 1], [], []>} : vector<24x8xbf16>, vector<8x32xbf16>, vector<24x32xf32> -> vector<24x32xf32>
    %307 = arith.addf %300, %306 : vector<24x32xf32>
    %308 = arith.addf %205, %307 : vector<24x32xf32>
    %309 = vector.broadcast %216 : vector<1x32xf32> to vector<24x32xf32>
    %310 = arith.addf %308, %309 : vector<24x32xf32>
    %cst_67 = arith.constant dense<0.000000e+00> : vector<24xf32>
    %311 = vector.multi_reduction <add>, %310, %cst_67 [1] : vector<24x32xf32> to vector<24xf32>
    %312 = vector.shape_cast %311 : vector<24xf32> to vector<24x1xf32>
    %cst_68 = arith.constant 3.200000e+01 : f32
    %313 = vector.broadcast %cst_68 : f32 to vector<24x1xf32>
    %314 = arith.divf %312, %313 : vector<24x1xf32>
    %315 = arith.mulf %310, %310 : vector<24x32xf32>
    %cst_69 = arith.constant dense<0.000000e+00> : vector<24xf32>
    %316 = vector.multi_reduction <add>, %315, %cst_69 [1] : vector<24x32xf32> to vector<24xf32>
    %317 = vector.shape_cast %316 : vector<24xf32> to vector<24x1xf32>
    %cst_70 = arith.constant 3.200000e+01 : f32
    %318 = vector.broadcast %cst_70 : f32 to vector<24x1xf32>
    %319 = arith.divf %317, %318 : vector<24x1xf32>
    %320 = arith.mulf %314, %314 : vector<24x1xf32>
    %321 = arith.subf %319, %320 : vector<24x1xf32>
    %322 = vector.broadcast %314 : vector<24x1xf32> to vector<24x32xf32>
    %323 = arith.subf %310, %322 : vector<24x32xf32>
    %cst_71 = arith.constant 9.99999974E-6 : f32
    %324 = vector.broadcast %cst_71 : f32 to vector<24x1xf32>
    %325 = arith.addf %321, %324 : vector<24x1xf32>
    %326 = math.rsqrt %325 : vector<24x1xf32>
    %327 = vector.broadcast %326 : vector<24x1xf32> to vector<24x32xf32>
    %328 = arith.mulf %323, %327 : vector<24x32xf32>
    %329 = vector.broadcast %217 : vector<1x32xf32> to vector<24x32xf32>
    %330 = arith.mulf %328, %329 : vector<24x32xf32>
    %331 = vector.broadcast %218 : vector<1x32xf32> to vector<24x32xf32>
    %332 = arith.addf %330, %331 : vector<24x32xf32>
    %333 = arith.truncf %332 : vector<24x32xf32> to vector<24x32xbf16>
    %cst_72 = arith.constant dense<0.000000e+00> : vector<24x64xf32>
    %334 = tpu.matmul %333, %210, %cst_72 {dimension_numbers = #tpu.dot_dimension_numbers<[1], [0], [0], [1], [0, 0, 1, 1], [], []>} : vector<24x32xbf16>, vector<32x64xbf16>, vector<24x64xf32> -> vector<24x64xf32>
    %335 = vector.broadcast %219 : vector<1x64xf32> to vector<24x64xf32>
    %336 = arith.addf %334, %335 : vector<24x64xf32>
    %337 = arith.mulf %336, %336 : vector<24x64xf32>
    %338 = arith.mulf %336, %337 : vector<24x64xf32>
    %cst_73 = arith.constant 4.471500e-02 : f32
    %339 = vector.broadcast %cst_73 : f32 to vector<24x64xf32>
    %340 = arith.mulf %339, %338 : vector<24x64xf32>
    %341 = arith.addf %336, %340 : vector<24x64xf32>
    %cst_74 = arith.constant 0.797884583 : f32
    %342 = vector.broadcast %cst_74 : f32 to vector<24x64xf32>
    %343 = arith.mulf %342, %341 : vector<24x64xf32>
    %344 = math.tanh %343 : vector<24x64xf32>
    %cst_75 = arith.constant 1.000000e+00 : f32
    %345 = vector.broadcast %cst_75 : f32 to vector<24x64xf32>
    %346 = arith.addf %345, %344 : vector<24x64xf32>
    %cst_76 = arith.constant 5.000000e-01 : f32
    %347 = vector.broadcast %cst_76 : f32 to vector<24x64xf32>
    %348 = arith.mulf %347, %346 : vector<24x64xf32>
    %349 = arith.mulf %336, %348 : vector<24x64xf32>
    %350 = arith.truncf %349 : vector<24x64xf32> to vector<24x64xbf16>
    %cst_77 = arith.constant dense<0.000000e+00> : vector<24x32xf32>
    %351 = tpu.matmul %350, %211, %cst_77 {dimension_numbers = #tpu.dot_dimension_numbers<[1], [1], [0], [0], [0, 0, 1, 0], [], []>} : vector<24x64xbf16>, vector<32x64xbf16>, vector<24x32xf32> -> vector<24x32xf32>
    %352 = vector.broadcast %220 : vector<1x32xf32> to vector<24x32xf32>
    %353 = arith.addf %351, %352 : vector<24x32xf32>
    %354 = arith.addf %310, %353 : vector<24x32xf32>
    %cst_78 = arith.constant dense<0.000000e+00> : vector<24xf32>
    %355 = vector.multi_reduction <add>, %354, %cst_78 [1] : vector<24x32xf32> to vector<24xf32>
    %356 = vector.shape_cast %355 : vector<24xf32> to vector<24x1xf32>
    %cst_79 = arith.constant 3.200000e+01 : f32
    %357 = vector.broadcast %cst_79 : f32 to vector<24x1xf32>
    %358 = arith.divf %356, %357 : vector<24x1xf32>
    %359 = arith.mulf %354, %354 : vector<24x32xf32>
    %cst_80 = arith.constant dense<0.000000e+00> : vector<24xf32>
    %360 = vector.multi_reduction <add>, %359, %cst_80 [1] : vector<24x32xf32> to vector<24xf32>
    %361 = vector.shape_cast %360 : vector<24xf32> to vector<24x1xf32>
    %cst_81 = arith.constant 3.200000e+01 : f32
    %362 = vector.broadcast %cst_81 : f32 to vector<24x1xf32>
    %363 = arith.divf %361, %362 : vector<24x1xf32>
    %364 = arith.mulf %358, %358 : vector<24x1xf32>
    %365 = arith.subf %363, %364 : vector<24x1xf32>
    %366 = vector.broadcast %358 : vector<24x1xf32> to vector<24x32xf32>
    %367 = arith.subf %354, %366 : vector<24x32xf32>
    %cst_82 = arith.constant 9.99999974E-6 : f32
    %368 = vector.broadcast %cst_82 : f32 to vector<24x1xf32>
    %369 = arith.addf %365, %368 : vector<24x1xf32>
    %370 = math.rsqrt %369 : vector<24x1xf32>
    %371 = vector.broadcast %370 : vector<24x1xf32> to vector<24x32xf32>
    %372 = arith.mulf %367, %371 : vector<24x32xf32>
    %373 = vector.broadcast %10 : vector<1x32xf32> to vector<24x32xf32>
    %374 = arith.mulf %372, %373 : vector<24x32xf32>
    %375 = vector.broadcast %11 : vector<1x32xf32> to vector<24x32xf32>
    %376 = arith.addf %374, %375 : vector<24x32xf32>
    %377 = arith.truncf %376 : vector<24x32xf32> to vector<24x32xbf16>
    %cst_83 = arith.constant dense<0.000000e+00> : vector<24x4xf32>
    %378 = tpu.matmul %377, %14, %cst_83 {dimension_numbers = #tpu.dot_dimension_numbers<[1], [1], [0], [0], [0, 0, 1, 0], [], []>} : vector<24x32xbf16>, vector<4x32xbf16>, vector<24x4xf32> -> vector<24x4xf32>
    %379 = vector.broadcast %12 : vector<1x4xf32> to vector<24x4xf32>
    %380 = arith.addf %378, %379 : vector<24x4xf32>
    %cst_84 = arith.constant 0.000000e+00 : f32
    %381 = vector.broadcast %cst_84 : f32 to vector<24x60xf32>
    %382 = tpu.concatenate %205, %354, %380, %381 in 1 : vector<24x32xf32>, vector<24x32xf32>, vector<24x4xf32>, vector<24x60xf32> -> vector<24x128xf32>
    %c0_85 = arith.constant 0 : index
    %c0_86 = arith.constant 0 : index
    %c0_87 = arith.constant 0 : index
    %383 = vector.load %arg4[%c0_85, %c0_86, %c0_87] : memref<1x24x128xf32, #tpu.memory_space<vmem>>, vector<1x24x128xf32>
    %384 = vector.shape_cast %383 : vector<1x24x128xf32> to vector<24x128xf32>
    %385 = vector.shape_cast %382 : vector<24x128xf32> to vector<1x24x128xf32>
    tpu.vector_store %arg4[%c0_85, %c0_86, %c0_87], %385 {strides = array<i32>} : memref<1x24x128xf32, #tpu.memory_space<vmem>>, vector<1x24x128xf32>,
    return
  }
  func.func @transform_0(%arg0: i32) -> (i32, i32, i32) {
    %c0_i32 = arith.constant 0 : i32
    %c0_i32_0 = arith.constant 0 : i32
    %c0_i32_1 = arith.constant 0 : i32
    return %arg0, %c0_i32, %c0_i32_0 : i32, i32, i32
  }
  func.func @transform_1(%arg0: i32) -> (i32, i32) {
    %c0_i32 = arith.constant 0 : i32
    %c0_i32_0 = arith.constant 0 : i32
    %c0_i32_1 = arith.constant 0 : i32
    return %c0_i32, %c0_i32_0 : i32, i32
  }
  func.func @transform_2(%arg0: i32) -> (i32, i32, i32) {
    %c0_i32 = arith.constant 0 : i32
    %c0_i32_0 = arith.constant 0 : i32
    %c0_i32_1 = arith.constant 0 : i32
    %c0_i32_2 = arith.constant 0 : i32
    return %c0_i32, %c0_i32_0, %c0_i32_1 : i32, i32, i32
  }
  func.func @transform_3(%arg0: i32) -> (i32, i32, i32) {
    %c0_i32 = arith.constant 0 : i32
    %c0_i32_0 = arith.constant 0 : i32
    %c0_i32_1 = arith.constant 0 : i32
    return %arg0, %c0_i32, %c0_i32_0 : i32, i32, i32
  }
}

</mosaic_0001>

<llo_original>
// kernel: tokengt_forward.1
$region0: #{tokengt_forward.1}
  #allocation0 [shape = 'u32[]', space=smem, size = 0x4, offset = 0x4, fixed_abs, tag = 'smem constant byte address 0x4 - core index']
  #allocation1 [shape = 'u32[72,128]{1,0:T(1,128)}', space=vmem, size = 0x9000, scoped, tag = 'internal scratch']
  %s0 = inlined_call_operand.vmem [shape: f32[4,24,8], index: 0, kind: input, shape index: {}]
  %s1 = inlined_call_operand.vmem [shape: f32[56,96], index: 1, kind: input, shape index: {}]
  %s2 = inlined_call_operand.vmem [shape: bf16[2,32,256], index: 2, kind: input, shape index: {}]
  %s3 = inlined_call_operand.vmem [shape: f32[4,24,128], index: 3, kind: output, shape index: {}]
  %s4 = sld [smem:[#allocation0]]
  $region45: #{tokengt_forward.1} parent=0
    _
  %s6 = ssub.s32 1, %s4
  %s7 = scalar_select 0, %s6, %s4
  loop: start=0, step=1, limit=6
  $region2: #{tokengt_forward.1} parent=0 // loop_pre_header
    _
  $region3: #{tokengt_forward.1} parent=0 // loop_header
    %s9 = sphi 0, %s13
    %p10 = scmp.ge.s32.totalorder %s9, 6
    %s19 = sphi 0, %s21
    %s22 = sphi 0, %s19
    %s23 = sphi 0, %s22
    %s39 = sphi 0, %s23
    %s43 = sphi 0, %s43
    %s45 = sphi 0, %s43
    %s46 = sphi 0, %s45
    %s60 = sphi 0, %s46
    %s64 = sphi 0, %s64
    %s66 = sphi 0, %s64
    %s67 = sphi 0, %s66
    %s81 = sphi 0, %s67
    %s87 = sphi 0, %s89
    %s90 = sphi 0, %s87
    %s91 = sphi 0, %s90
    %s107 = sphi 0, %s91
  $region4: #{tokengt_forward.1} parent=0 // loop_header_branch
    %12 = sbr.rel (%p10) target = $region8
  $region5: #{tokengt_forward.1} parent=0 // loop_body
    %s14 = ssub.s32 %s9, 1
    %s15 = ssub.s32 %s9, 2
    %s16 = sadd.s32 %s9, 1
    %s17 = ssub.s32 %s9, %s16
    %p18 = scmp.eq.s32.totalorder %s17, 0
    %s20 = sadd.s32 %s19, 1
    %s21 = scalar_select %p18, %s19, %s20
    %p24 = pneg %p18
    %p25 = scmp.eq.s32.totalorder %s9, 3
    %p26 = por %p24, %p25
    %p27 = scmp.ne.s32.totalorder %s19, %s22
    %p28 = scmp.eq.s32.totalorder %s9, 0
    %p29 = por %p27, %p28
    %p30 = scmp.ne.s32.totalorder %s19, %s22
    %p31 = scmp.eq.s32.totalorder %s14, 3
    %p32 = por %p30, %p31
    %p33 = scmp.ne.s32.totalorder %s22, %s23
    %p34 = scmp.eq.s32.totalorder %s14, 0
    %p35 = por %p33, %p34
    %p36 = scmp.ne.s32.totalorder %s22, %s23
    %p37 = scmp.eq.s32.totalorder %s15, 3
    %p38 = por %p36, %p37
    %p40 = scmp.ne.s32.totalorder %s23, %s39
    %p41 = scmp.eq.s32.totalorder %s15, 0
    %p42 = por %p40, %p41
    %s44 = sadd.s32 %s43, 1
    %p47 = scmp.eq.s32.totalorder %s9, 3
    %p48 = scmp.ne.s32.totalorder %s43, %s45
    %p49 = scmp.eq.s32.totalorder %s9, 0
    %p50 = por %p48, %p49
    %p51 = scmp.ne.s32.totalorder %s43, %s45
    %p52 = scmp.eq.s32.totalorder %s14, 3
    %p53 = por %p51, %p52
    %p54 = scmp.ne.s32.totalorder %s45, %s46
    %p55 = scmp.eq.s32.totalorder %s14, 0
    %p56 = por %p54, %p55
    %p57 = scmp.ne.s32.totalorder %s45, %s46
    %p58 = scmp.eq.s32.totalorder %s15, 3
    %p59 = por %p57, %p58
    %p61 = scmp.ne.s32.totalorder %s46, %s60
    %p62 = scmp.eq.s32.totalorder %s15, 0
    %p63 = por %p61, %p62
    %s65 = sadd.s32 %s64, 1
    %p68 = scmp.eq.s32.totalorder %s9, 3
    %p69 = scmp.ne.s32.totalorder %s64, %s66
    %p70 = scmp.eq.s32.totalorder %s9, 0
    %p71 = por %p69, %p70
    %p72 = scmp.ne.s32.totalorder %s64, %s66
    %p73 = scmp.eq.s32.totalorder %s14, 3
    %p74 = por %p72, %p73
    %p75 = scmp.ne.s32.totalorder %s66, %s67
    %p76 = scmp.eq.s32.totalorder %s14, 0
    %p77 = por %p75, %p76
    %p78 = scmp.ne.s32.totalorder %s66, %s67
    %p79 = scmp.eq.s32.totalorder %s15, 3
    %p80 = por %p78, %p79
    %p82 = scmp.ne.s32.totalorder %s67, %s81
    %p83 = scmp.eq.s32.totalorder %s15, 0
    %p84 = por %p82, %p83
    %s85 = ssub.s32 %s9, %s16
    %p86 = scmp.eq.s32.totalorder %s85, 0
    %s88 = sadd.s32 %s87, 1
    %s89 = scalar_select %p86, %s87, %s88
    %p92 = pneg %p86
    %p93 = scmp.eq.s32.totalorder %s9, 3
    %p94 = por %p92, %p93
    %p95 = scmp.ne.s32.totalorder %s87, %s90
    %p96 = scmp.eq.s32.totalorder %s9, 0
    %p97 = por %p95, %p96
    %p98 = scmp.ne.s32.totalorder %s87, %s90
    %p99 = scmp.eq.s32.totalorder %s14, 3
    %p100 = por %p98, %p99
    %p101 = scmp.ne.s32.totalorder %s90, %s91
    %p102 = scmp.eq.s32.totalorder %s14, 0
    %p103 = por %p101, %p102
    %p104 = scmp.ne.s32.totalorder %s90, %s91
    %p105 = scmp.eq.s32.totalorder %s15, 3
    %p106 = por %p104, %p105
    %p108 = scmp.ne.s32.totalorder %s91, %s107
    %p109 = scmp.eq.s32.totalorder %s15, 0
    %p110 = por %p108, %p109
    %p111 = scmp.le.s32.totalorder 1, %s9
    %p112 = scmp.lt.s32.totalorder %s9, 5
    %p113 = pnand %p111, %p112
    %p114 = pneg %p113
    // Predicated region
    $region9: #{tokengt_forward.1} parent=5 // pred_check
      _
    $region10: #{tokengt_forward.1} parent=5 // pred_check_branch
      %116 = sbr.rel (%p113) target = $region12
    $region11: #{tokengt_forward.1} parent=5 // pred_region
      %s117 = ssub.s32 %s9, 1
      // Predicated region
      $region13: #{tokengt_forward.1} parent=11 // pred_check
        %p118 = pneg %p56
      $region14: #{tokengt_forward.1} parent=11 // pred_check_branch
        %120 = sbr.rel (%p118) target = $region16
      $region15: #{tokengt_forward.1} parent=11 // pred_region
        _
      $region16: #{tokengt_forward.1} parent=11 // pred_fallthru
        _
      // Predicated region
      $region17: #{tokengt_forward.1} parent=11 // pred_check
        %p121 = pneg %p77
      $region18: #{tokengt_forward.1} parent=11 // pred_check_branch
        %123 = sbr.rel (%p121) target = $region20
      $region19: #{tokengt_forward.1} parent=11 // pred_region
        _
      $region20: #{tokengt_forward.1} parent=11 // pred_fallthru
        _
    $region12: #{tokengt_forward.1} parent=5 // pred_fallthru
      _
    %p124 = scmp.lt.s32.totalorder %s9, 4
    // Predicated region
    $region21: #{tokengt_forward.1} parent=5 // pred_check
      %p125 = pneg %p124
    $region22: #{tokengt_forward.1} parent=5 // pred_check_branch
      %127 = sbr.rel (%p125) target = $region24
    $region23: #{tokengt_forward.1} parent=5 // pred_region
      // Predicated region
      $region25: #{tokengt_forward.1} parent=23 // pred_check
        %p128 = pneg %p29
      $region26: #{tokengt_forward.1} parent=23 // pred_check_branch
        %130 = sbr.rel (%p128) target = $region28
      $region27: #{tokengt_forward.1} parent=23 // pred_region
        %p131 = scmp.lt.s32.totalorder %s9, 3
        %s132 = scalar_select %p131, %s9, 3
        %s133 = smul.addr %s132, 3
        %s134 = smul.addr %s133, 8
        %s135 = scalar_lea.vmem %s0, %s134
      $region28: #{tokengt_forward.1} parent=23 // pred_fallthru
        _
    $region24: #{tokengt_forward.1} parent=5 // pred_fallthru
      _
    %p136 = scmp.le.s32.totalorder 1, %s9
    %p137 = scmp.lt.s32.totalorder %s9, 5
    %p138 = pnand %p136, %p137
    %p139 = pneg %p138
    // Predicated region
    $region29: #{tokengt_forward.1} parent=5 // pred_check
      _
    $region30: #{tokengt_forward.1} parent=5 // pred_check_branch
      %141 = sbr.rel (%p138) target = $region32
    $region31: #{tokengt_forward.1} parent=5 // pred_region
      %s142 = ssub.s32 %s9, 1
      %p143 = scmp.lt.s32.totalorder %s14, 3
      %s144 = scalar_select %p143, %s14, 3
      %s145 = smul.addr %s144, 3
      %s146 = smul.addr %s145, 8
      %s147 = scalar_lea.vmem %s0, %s146
      %p148 = pneg %p35
      %p149 = pneg %p32
      %p150 = pneg %p56
      %p151 = pneg %p53
      %p152 = pneg %p77
      %p153 = pneg %p74
      %p154 = pneg %p103
      %p155 = pneg %p100
      %p156 = scmp.lt.s32.totalorder %s14, 3
      %s157 = scalar_select %p156, %s14, 3
      %s158 = smul.addr %s157, 3
      %s159 = smul.addr %s158, 8
      %s160 = scalar_lea.vmem %s3, %s159
      %p161 = scmp.lt.s32.totalorder %s14, 3
      %s162 = scalar_select %p161, %s14, 3
      %s163 = smul.addr %s162, 3
      %s164 = smul.addr %s163, 8
      %s165 = scalar_lea.vmem %s0, %s164
      %p166 = scmp.lt.s32.totalorder %s14, 3
      %s167 = scalar_select %p166, %s14, 3
      %s168 = smul.addr %s167, 3
      %s169 = smul.addr %s168, 8
      %s170 = scalar_lea.vmem %s3, %s169
      %v172 = vld [vmem:[%s1] sm:$0xff]
      %v173 = vld [vmem:[%s1 + $0x8] sm:$0xff]
      %v174 = vld [vmem:[%s1 + $0x10] sm:$0xff]
      %v175 = vld [vmem:[%s1 + $0x18] sm:$0xff]
      %v176 = vld [vmem:[%s1 + $0x20] sm:$0xff]
      %v177 = vld [vmem:[%s1 + $0x28] sm:$0xff]
      %v178 = vld [vmem:[%s1 + $0x30] sm:$0xff]
      %v179 = vpack.c.bf16 %v172, %v172
      %v180 = vpack.c.bf16 %v173, %v173
      %v181 = vpack.c.bf16 %v174, %v174
      %v182 = vpack.c.bf16 %v176, %v176
      %v183 = vld [vmem:[%s165] sm:$0xff]
      %v184 = vld [vmem:[%s165 + $0x8] sm:$0xff]
      %v185 = vld [vmem:[%s165 + $0x10] sm:$0xff]
      %v186 = vpack.c.bf16 %v183, %v183
      %v187 = vcvt.f32.s32.to.zero.pseudo %v184
      %v188 = vcvt.f32.s32.to.zero.pseudo %v185
      %v189 = vperm.slane %v175, 2
      %vm190 = vcmask 64512
      %v192 = vsel %vm190, %v186, 0
      %vm194 = vcmask 1043456
      %v196 = vsel %vm194, %v179, 0
      %198 = vmatpush.bf16.msra.mxu0 0
      %199 = vmatpush.bf16.msra.mxu0 0
      %200 = vmatpush.bf16.msra.mxu0 0
      %201 = vmatpush.bf16.msra.mxu0 0
      %202 = vmatpush.bf16.msra.mxu0 0
      %203 = vmatpush.bf16.msra.mxu0 0
      %204 = vmatpush.bf16.msra.mxu0 0
      %205 = vmatpush.bf16.msra.mxu0 %v196
      %206 = vmatmul.bf16.gmra.mxu0 %v192
      %v207 = vpop.f32.mrf.mxu0
      %v208 = vadd.f32 %v189, %v207
      %v209 = vpop.f32.mrf.mxu0
      %210 = vdwg.mxu0
      %v211 = vperm.slane %v175, 1
      %v212 = vadd.f32 %v208, %v211
      %214 = vrot.lane.b32.xlu0 %v186, 124
      %v215 = vpop.permute.xlu0 %214
      %vm216 = vcmask 31744
      %v218 = vsel %vm216, %v215, 0
      %vm220 = vcmask 1041408
      %v222 = vsel %vm220, %v180, 0
      %224 = vmatpush.bf16.msra.mxu0 0
      %225 = vmatpush.bf16.msra.mxu0 0
      %226 = vmatpush.bf16.msra.mxu0 0
      %227 = vmatpush.bf16.msra.mxu0 0
      %228 = vmatpush.bf16.msra.mxu0 0
      %229 = vmatpush.bf16.msra.mxu0 0
      %230 = vmatpush.bf16.msra.mxu0 0
      %231 = vmatpush.bf16.msra.mxu0 %v222
      %232 = vmatmul.bf16.gmra.mxu0 %v218
      %v233 = vpop.f32.mrf.mxu0
      %v234 = vadd.f32 0.0, %v233
      %v235 = vpop.f32.mrf.mxu0
      %236 = vdwg.mxu0
      %v238 = vsel %vm220, %v181, 0
      %240 = vmatpush.bf16.msra.mxu0 0
      %241 = vmatpush.bf16.msra.mxu0 0
      %242 = vmatpush.bf16.msra.mxu0 0
      %243 = vmatpush.bf16.msra.mxu0 0
      %244 = vmatpush.bf16.msra.mxu0 0
      %245 = vmatpush.bf16.msra.mxu0 0
      %246 = vmatpush.bf16.msra.mxu0 0
      %247 = vmatpush.bf16.msra.mxu0 %v238
      %248 = vmatmul.bf16.gmra.mxu0 %v218
      %v249 = vpop.f32.mrf.mxu0
      %v250 = vadd.f32 0.0, %v249
      %v251 = vpop.f32.mrf.mxu0
      %252 = vdwg.mxu0
      %v253 = vpack.c.bf16 %v250, %v234
      %v254 = vlaneseq
      %v255 = vand.u32 %v254, 127
      %256 = vset.pattern.permute.xlu0 0
      %257 = vperm.xlu0 %256, %v187
      %v258 = vpop.permute.xlu0 %257
      %259 = vset.pattern.permute.xlu0 0
      %260 = vperm.xlu0 %259, %v188
      %v261 = vpop.permute.xlu0 %260
      %vm262 = vcmp.eq.s32.totalorder %v255, %v258
      %vm263 = vcmp.eq.s32.totalorder %v255, %v261
      %v264 = vsub.s32 %v255, 8
      %265 = vset.pattern.permute.xlu0 1
      %266 = vperm.xlu0 %265, %v187
      %v267 = vpop.permute.xlu0 %266
      %268 = vset.pattern.permute.xlu0 1
      %269 = vperm.xlu0 %268, %v188
      %v270 = vpop.permute.xlu0 %269
      %vm271 = vcmp.eq.s32.totalorder %v264, %v267
      %vm272 = vcmp.eq.s32.totalorder %v264, %v270
      %vm273 = vmor %vm262, %vm271
      %vm274 = vmor %vm263, %vm272
      %v275 = vsel %vm273, 1, 0
      %v276 = vsel %vm274, 1, 0
      %v277 = vcvt.s32.f32 %v275
      %v278 = vcvt.s32.f32 %v276
      %v279 = vpack.c.bf16 %v278, %v277
      %280 = vrot.lane.b32.xlu0 %v187, 127
      %v281 = vpop.permute.xlu0 %280
      %282 = vrot.lane.b32.xlu0 %v188, 127
      %v283 = vpop.permute.xlu0 %282
      %vm284 = vcmp.eq.s32.totalorder %v187, %v281
      %vm285 = vcmp.eq.s32.totalorder %v188, %v283
      %v286 = vsel %vm284, 1, 0
      %v287 = vsel %vm285, 1, 0
      %v288 = vcvt.s32.f32 %v286
      %v289 = vcvt.s32.f32 %v287
      %v290 = vperm.slane %v175, 0
      %vm291 = vcmask 130048
      %v293 = vsel %vm291, %v279, 0
      %295 = vmatpush.bf16.msra.mxu0 0
      %296 = vmatpush.bf16.msra.mxu0 0
      %297 = vmatpush.bf16.msra.mxu0 0
      %298 = vmatpush.bf16.msra.mxu0 0
      %299 = vmatpush.bf16.msra.mxu0 0
      %300 = vmatpush.bf16.msra.mxu0 0
      %301 = vmatpush.bf16.msra.mxu0 0
      %302 = vmatpush.bf16.msra.mxu0 %v253
      %303 = vmatmul.bf16.gmra.mxu0 %v293
      %v304 = vpop.f32.mrf.mxu0
      %v305 = vadd.f32 %v290, %v304
      %v306 = vpop.f32.mrf.mxu0
      %v307 = vadd.f32 %v290, %v306
      %308 = vdwg.mxu0
      %v310 = vrot.slane %v175, 7
      %v312 = vsub.f32 %v175, %v310
      %314 = vset.pattern.permute.xlu0 0
      %315 = vperm.xlu0 %314, %v288
      %v316 = vpop.permute.xlu0 %315
      %319 = vset.pattern.permute.xlu0 0
      %320 = vperm.xlu0 %319, %v289
      %v321 = vpop.permute.xlu0 %320
      %v323 = vperm.slane %v312, 1
      %v324 = vmul.f32 %v316, %v323
      %v325 = vmul.f32 %v321, %v323
      %v326 = vadd.f32 %v305, %v324
      %v327 = vadd.f32 %v307, %v325
      %v328 = vld [vmem:[%s2] sm:$0xff]
      %v329 = vld [vmem:[%s2 + $0x8] sm:$0xff]
      %v330 = vld [vmem:[%s2 + $0x10] sm:$0xff]
      %v331 = vld [vmem:[%s2 + $0x18] sm:$0xff]
      %vm332 = vcmask 261120
      %v333 = vsel %vm332, %v212, 0.0
      %334 = vadd.xlane.f32.xlu0 %v333
      %v335 = vpop.xlane.xlu0 %334
      %v336 = vsel %vm332, %v326, 0.0
      %337 = vadd.xlane.f32.xlu0 %v336
      %v338 = vpop.xlane.xlu0 %337
      %v339 = vsel %vm332, %v327, 0.0
      %340 = vadd.xlane.f32.xlu0 %v339
      %v341 = vpop.xlane.xlu0 %340
      %v342 = vrcp.pop 32.0
      %v343 = vmul.f32 32.0, %v342
      %v344 = vsub.f32 1.0, %v343
      %v345 = vmul.f32 %v342, %v344
      %v346 = vadd.f32 %v342, %v345
      %vm347 = vweird.f32 %v342
      %v348 = vsel %vm347, %v342, %v346
      %v349 = vmul.f32 %v335, %v348
      %v350 = vmul.f32 %v338, %v348
      %v351 = vmul.f32 %v341, %v348
      %v352 = vmul.f32 %v212, %v212
      %v353 = vmul.f32 %v326, %v326
      %v354 = vmul.f32 %v327, %v327
      %v355 = vsel %vm332, %v352, 0.0
      %356 = vadd.xlane.f32.xlu0 %v355
      %v357 = vpop.xlane.xlu0 %356
      %v358 = vsel %vm332, %v353, 0.0
      %359 = vadd.xlane.f32.xlu0 %v358
      %v360 = vpop.xlane.xlu0 %359
      %v361 = vsel %vm332, %v354, 0.0
      %362 = vadd.xlane.f32.xlu0 %v361
      %v363 = vpop.xlane.xlu0 %362
      %v364 = vmul.f32 %v357, %v348
      %v365 = vmul.f32 %v360, %v348
      %v366 = vmul.f32 %v363, %v348
      %v367 = vmul.f32 %v349, %v349
      %v368 = vmul.f32 %v350, %v350
      %v369 = vmul.f32 %v351, %v351
      %v370 = vsub.f32 %v364, %v367
      %v371 = vsub.f32 %v365, %v368
      %v372 = vsub.f32 %v366, %v369
      %v373 = vsub.f32 %v212, %v349
      %v374 = vsub.f32 %v326, %v350
      %v375 = vsub.f32 %v327, %v351
      %v376 = vadd.f32 %v370, 1e-05
      %v377 = vadd.f32 %v371, 1e-05
      %v378 = vadd.f32 %v372, 1e-05
      %v379 = vrsqrt.pop %v376
      %v380 = vmul.f32 %v379, %v376
      %v381 = vmul.f32 %v380, %v379
      %v382 = vmul.f32 0.5, %v381
      %v383 = vsub.f32 1.5, %v382
      %v384 = vmul.f32 %v379, %v383
      %vm385 = vweird.f32 %v376
      %vm386 = vweird.f32 %v379
      %vm387 = vmor %vm385, %vm386
      %v388 = vsel %vm387, %v379, %v384
      %v389 = vrsqrt.pop %v377
      %v390 = vmul.f32 %v389, %v377
      %v391 = vmul.f32 %v390, %v389
      %v392 = vmul.f32 0.5, %v391
      %v393 = vsub.f32 1.5, %v392
      %v394 = vmul.f32 %v389, %v393
      %vm395 = vweird.f32 %v377
      %vm396 = vweird.f32 %v389
      %vm397 = vmor %vm395, %vm396
      %v398 = vsel %vm397, %v389, %v394
      %v399 = vrsqrt.pop %v378
      %v400 = vmul.f32 %v399, %v378
      %v401 = vmul.f32 %v400, %v399
      %v402 = vmul.f32 0.5, %v401
      %v403 = vsub.f32 1.5, %v402
      %v404 = vmul.f32 %v399, %v403
      %vm405 = vweird.f32 %v378
      %vm406 = vweird.f32 %v399
      %vm407 = vmor %vm405, %vm406
      %v408 = vsel %vm407, %v399, %v404
      %v409 = vmul.f32 %v373, %v388
      %v410 = vmul.f32 %v374, %v398
      %v411 = vmul.f32 %v375, %v408
      %v412 = vperm.slane %v177, 0
      %v413 = vmul.f32 %v409, %v412
      %v414 = vmul.f32 %v410, %v412
      %v415 = vmul.f32 %v411, %v412
      %v416 = vperm.slane %v177, 1
      %v417 = vadd.f32 %v413, %v416
      %v418 = vadd.f32 %v414, %v416
      %v419 = vadd.f32 %v415, %v416
      %v420 = vpack.c.bf16 %v418, %v417
      %v421 = vpack.c.bf16 %v419, %v419
      %v422 = vperm.slane %v177, 2
      %v427 = vunpack.c.l.b16 %v328
      %v428 = vunpack.c.l.b16 %v329
      %v429 = vunpack.c.l.b16 %v330
      %v430 = vunpack.c.l.b16 %v331
      %v431 = vpack.c.b16 %v428, %v427
      %v432 = vpack.c.b16 %v430, %v429
      %v436 = vsel %vm332, %v420, 0
      %v439 = vsel %vm332, %v421, 0
      %441 = vmatpush.bf16.msra.mxu0 0
      %442 = vmatpush.bf16.msra.mxu0 0
      %443 = vmatpush.bf16.msra.mxu0 0
      %444 = vmatpush.bf16.msra.mxu0 0
      %445 = vmatpush.bf16.msra.mxu0 0
      %446 = vmatpush.bf16.msra.mxu0 0
      %447 = vmatpush.bf16.msra.mxu0 %v432
      %448 = vmatpush.bf16.msra.mxu0 %v431
      %449 = vmatmul.bf16.gmra.mxu0 %v436
      %v450 = vpop.f32.mrf.mxu0
      %v451 = vadd.f32 %v422, %v450
      %v452 = vpop.f32.mrf.mxu0
      %v453 = vadd.f32 %v422, %v452
      %454 = vmatmul.bf16.gmra.mxu0 %v439
      %v455 = vpop.f32.mrf.mxu0
      %v456 = vadd.f32 %v422, %v455
      %v457 = vpop.f32.mrf.mxu0
      %458 = vdwg.mxu0
      %v459 = vmul.f32 %v451, 0.35355338
      %v460 = vmul.f32 %v453, 0.35355338
      %v461 = vmul.f32 %v456, 0.35355338
      %v462 = vpack.c.bf16 %v459, %v459
      %v463 = vpack.c.bf16 %v460, %v460
      %v464 = vpack.c.bf16 %v461, %v461
      %v465 = vpack.c.bf16 %v451, %v451
      %v466 = vpack.c.bf16 %v453, %v453
      %v467 = vpack.c.bf16 %v456, %v456
      %v471 = vunpack.c.l.b16 %v462
      %v472 = vunpack.c.l.b16 %v463
      %v473 = vunpack.c.l.b16 %v464
      %v474 = vpack.c.b16 %v472, %v471
      %v475 = vpack.c.b16 %v473, %v473
      %v479 = vunpack.c.l.b16 %v465
      %v480 = vunpack.c.l.b16 %v466
      %v481 = vunpack.c.l.b16 %v467
      %v482 = vpack.c.b16 %v480, %v479
      %v483 = vpack.c.b16 %v481, %v481
      %484 = vrot.lane.b32.xlu0 %v482, 96
      %v485 = vpop.permute.xlu0 %484
      %486 = vrot.lane.b32.xlu0 %v483, 96
      %v487 = vpop.permute.xlu0 %486
      %v489 = vsel %vm190, %v474, 0
      %v492 = vsel %vm190, %v475, 0
      %v495 = vsel %vm190, %v485, 0
      %v498 = vsel %vm190, %v487, 0
      %500 = vmatpush.bf16.xpose.msra.mxu0 0
      %501 = vmatpush.bf16.xpose.msra.mxu0 0
      %502 = vmatpush.bf16.xpose.msra.mxu0 0
      %503 = vmatpush.bf16.xpose.msra.mxu0 0
      %504 = vmatpush.bf16.xpose.msra.mxu0 0
      %505 = vmatpush.bf16.xpose.msra.mxu0 0
      %506 = vmatpush.bf16.xpose.msra.mxu0 %v498
      %507 = vmatpush.bf16.xpose.msra.mxu0 %v495
      %508 = vmatmul.bf16.gmra.mxu0 %v489
      %v509 = vpop.f32.mrf.mxu0
      %v510 = vadd.f32 0.0, %v509
      %v511 = vpop.f32.mrf.mxu0
      %v512 = vadd.f32 0.0, %v511
      %513 = vmatmul.bf16.gmra.mxu0 %v492
      %v514 = vpop.f32.mrf.mxu0
      %v515 = vadd.f32 0.0, %v514
      %v516 = vpop.f32.mrf.mxu0
      %517 = vdwg.mxu0
      %518 = vrot.lane.b32.xlu0 %v474, 120
      %v519 = vpop.permute.xlu0 %518
      %520 = vrot.lane.b32.xlu0 %v475, 120
      %v521 = vpop.permute.xlu0 %520
      %522 = vrot.lane.b32.xlu0 %v482, 88
      %v523 = vpop.permute.xlu0 %522
      %524 = vrot.lane.b32.xlu0 %v483, 88
      %v525 = vpop.permute.xlu0 %524
      %v527 = vsel %vm190, %v519, 0
      %v530 = vsel %vm190, %v521, 0
      %v533 = vsel %vm190, %v523, 0
      %v536 = vsel %vm190, %v525, 0
      %538 = vmatpush.bf16.xpose.msra.mxu0 0
      %539 = vmatpush.bf16.xpose.msra.mxu0 0
      %540 = vmatpush.bf16.xpose.msra.mxu0 0
      %541 = vmatpush.bf16.xpose.msra.mxu0 0
      %542 = vmatpush.bf16.xpose.msra.mxu0 0
      %543 = vmatpush.bf16.xpose.msra.mxu0 0
      %544 = vmatpush.bf16.xpose.msra.mxu0 %v536
      %545 = vmatpush.bf16.xpose.msra.mxu0 %v533
      %546 = vmatmul.bf16.gmra.mxu0 %v527
      %v547 = vpop.f32.mrf.mxu0
      %v548 = vadd.f32 0.0, %v547
      %v549 = vpop.f32.mrf.mxu0
      %v550 = vadd.f32 0.0, %v549
      %551 = vmatmul.bf16.gmra.mxu0 %v530
      %v552 = vpop.f32.mrf.mxu0
      %v553 = vadd.f32 0.0, %v552
      %v554 = vpop.f32.mrf.mxu0
      %555 = vdwg.mxu0
      %556 = vrot.lane.b32.xlu0 %v474, 112
      %v557 = vpop.permute.xlu0 %556
      %558 = vrot.lane.b32.xlu0 %v475, 112
      %v559 = vpop.permute.xlu0 %558
      %560 = vrot.lane.b32.xlu0 %v482, 80
      %v561 = vpop.permute.xlu0 %560
      %562 = vrot.lane.b32.xlu0 %v483, 80
      %v563 = vpop.permute.xlu0 %562
      %v565 = vsel %vm190, %v557, 0
      %v568 = vsel %vm190, %v559, 0
      %v571 = vsel %vm190, %v561, 0
      %v574 = vsel %vm190, %v563, 0
      %576 = vmatpush.bf16.xpose.msra.mxu0 0
      %577 = vmatpush.bf16.xpose.msra.mxu0 0
      %578 = vmatpush.bf16.xpose.msra.mxu0 0
      %579 = vmatpush.bf16.xpose.msra.mxu0 0
      %580 = vmatpush.bf16.xpose.msra.mxu0 0
      %581 = vmatpush.bf16.xpose.msra.mxu0 0
      %582 = vmatpush.bf16.xpose.msra.mxu0 %v574
      %583 = vmatpush.bf16.xpose.msra.mxu0 %v571
      %584 = vmatmul.bf16.gmra.mxu0 %v565
      %v585 = vpop.f32.mrf.mxu0
      %v586 = vadd.f32 0.0, %v585
      %v587 = vpop.f32.mrf.mxu0
      %v588 = vadd.f32 0.0, %v587
      %589 = vmatmul.bf16.gmra.mxu0 %v568
      %v590 = vpop.f32.mrf.mxu0
      %v591 = vadd.f32 0.0, %v590
      %v592 = vpop.f32.mrf.mxu0
      %593 = vdwg.mxu0
      %594 = vrot.lane.b32.xlu0 %v474, 104
      %v595 = vpop.permute.xlu0 %594
      %596 = vrot.lane.b32.xlu0 %v475, 104
      %v597 = vpop.permute.xlu0 %596
      %598 = vrot.lane.b32.xlu0 %v482, 72
      %v599 = vpop.permute.xlu0 %598
      %600 = vrot.lane.b32.xlu0 %v483, 72
      %v601 = vpop.permute.xlu0 %600
      %v603 = vsel %vm190, %v595, 0
      %v606 = vsel %vm190, %v597, 0
      %v609 = vsel %vm190, %v599, 0
      %v612 = vsel %vm190, %v601, 0
      %614 = vmatpush.bf16.xpose.msra.mxu0 0
      %615 = vmatpush.bf16.xpose.msra.mxu0 0
      %616 = vmatpush.bf16.xpose.msra.mxu0 0
      %617 = vmatpush.bf16.xpose.msra.mxu0 0
      %618 = vmatpush.bf16.xpose.msra.mxu0 0
      %619 = vmatpush.bf16.xpose.msra.mxu0 0
      %620 = vmatpush.bf16.xpose.msra.mxu0 %v612
      %621 = vmatpush.bf16.xpose.msra.mxu0 %v609
      %622 = vmatmul.bf16.gmra.mxu0 %v603
      %v623 = vpop.f32.mrf.mxu0
      %v624 = vadd.f32 0.0, %v623
      %v625 = vpop.f32.mrf.mxu0
      %v626 = vadd.f32 0.0, %v625
      %627 = vmatmul.bf16.gmra.mxu0 %v606
      %v628 = vpop.f32.mrf.mxu0
      %v629 = vadd.f32 0.0, %v628
      %v630 = vpop.f32.mrf.mxu0
      %631 = vdwg.mxu0
      %vm632 = vcmask 195584
      %v633 = vsel %vm632, %v510, -inf
      %634 = vmax.xlane.f32.xlu0 %v633
      %v635 = vpop.xlane.xlu0 %634
      %v636 = vsel %vm632, %v512, -inf
      %637 = vmax.xlane.f32.xlu0 %v636
      %v638 = vpop.xlane.xlu0 %637
      %v639 = vsel %vm632, %v515, -inf
      %640 = vmax.xlane.f32.xlu0 %v639
      %v641 = vpop.xlane.xlu0 %640
      %v642 = vsel %vm632, %v548, -inf
      %643 = vmax.xlane.f32.xlu0 %v642
      %v644 = vpop.xlane.xlu0 %643
      %v645 = vsel %vm632, %v550, -inf
      %646 = vmax.xlane.f32.xlu0 %v645
      %v647 = vpop.xlane.xlu0 %646
      %v648 = vsel %vm632, %v553, -inf
      %649 = vmax.xlane.f32.xlu0 %v648
      %v650 = vpop.xlane.xlu0 %649
      %v651 = vsel %vm632, %v586, -inf
      %652 = vmax.xlane.f32.xlu0 %v651
      %v653 = vpop.xlane.xlu0 %652
      %v654 = vsel %vm632, %v588, -inf
      %655 = vmax.xlane.f32.xlu0 %v654
      %v656 = vpop.xlane.xlu0 %655
      %v657 = vsel %vm632, %v591, -inf
      %658 = vmax.xlane.f32.xlu0 %v657
      %v659 = vpop.xlane.xlu0 %658
      %v660 = vsel %vm632, %v624, -inf
      %661 = vmax.xlane.f32.xlu0 %v660
      %v662 = vpop.xlane.xlu0 %661
      %v663 = vsel %vm632, %v626, -inf
      %664 = vmax.xlane.f32.xlu0 %v663
      %v665 = vpop.xlane.xlu0 %664
      %v666 = vsel %vm632, %v629, -inf
      %667 = vmax.xlane.f32.xlu0 %v666
      %v668 = vpop.xlane.xlu0 %667
      %v669 = vsub.f32 %v510, %v635
      %v670 = vsub.f32 %v512, %v638
      %v671 = vsub.f32 %v515, %v641
      %v672 = vsub.f32 %v548, %v644
      %v673 = vsub.f32 %v550, %v647
      %v674 = vsub.f32 %v553, %v650
      %v675 = vsub.f32 %v586, %v653
      %v676 = vsub.f32 %v588, %v656
      %v677 = vsub.f32 %v591, %v659
      %v678 = vsub.f32 %v624, %v662
      %v679 = vsub.f32 %v626, %v665
      %v680 = vsub.f32 %v629, %v668
      %v681 = vmul.f32 %v669, 1.442695
      %v682 = vpow.pop %v681
      %v683 = vmul.f32 %v670, 1.442695
      %v684 = vpow.pop %v683
      %v685 = vmul.f32 %v671, 1.442695
      %v686 = vpow.pop %v685
      %v687 = vmul.f32 %v672, 1.442695
      %v688 = vpow.pop %v687
      %v689 = vmul.f32 %v673, 1.442695
      %v690 = vpow.pop %v689
      %v691 = vmul.f32 %v674, 1.442695
      %v692 = vpow.pop %v691
      %v693 = vmul.f32 %v675, 1.442695
      %v694 = vpow.pop %v693
      %v695 = vmul.f32 %v676, 1.442695
      %v696 = vpow.pop %v695
      %v697 = vmul.f32 %v677, 1.442695
      %v698 = vpow.pop %v697
      %v699 = vmul.f32 %v678, 1.442695
      %v700 = vpow.pop %v699
      %v701 = vmul.f32 %v679, 1.442695
      %v702 = vpow.pop %v701
      %v703 = vmul.f32 %v680, 1.442695
      %v704 = vpow.pop %v703
      %v705 = vsel %vm632, %v682, 0.0
      %706 = vadd.xlane.f32.xlu0 %v705
      %v707 = vpop.xlane.xlu0 %706
      %v708 = vsel %vm632, %v684, 0.0
      %709 = vadd.xlane.f32.xlu0 %v708
      %v710 = vpop.xlane.xlu0 %709
      %v711 = vsel %vm632, %v686, 0.0
      %712 = vadd.xlane.f32.xlu0 %v711
      %v713 = vpop.xlane.xlu0 %712
      %v714 = vsel %vm632, %v688, 0.0
      %715 = vadd.xlane.f32.xlu0 %v714
      %v716 = vpop.xlane.xlu0 %715
      %v717 = vsel %vm632, %v690, 0.0
      %718 = vadd.xlane.f32.xlu0 %v717
      %v719 = vpop.xlane.xlu0 %718
      %v720 = vsel %vm632, %v692, 0.0
      %721 = vadd.xlane.f32.xlu0 %v720
      %v722 = vpop.xlane.xlu0 %721
      %v723 = vsel %vm632, %v694, 0.0
      %724 = vadd.xlane.f32.xlu0 %v723
      %v725 = vpop.xlane.xlu0 %724
      %v726 = vsel %vm632, %v696, 0.0
      %727 = vadd.xlane.f32.xlu0 %v726
      %v728 = vpop.xlane.xlu0 %727
      %v729 = vsel %vm632, %v698, 0.0
      %730 = vadd.xlane.f32.xlu0 %v729
      %v731 = vpop.xlane.xlu0 %730
      %v732 = vsel %vm632, %v700, 0.0
      %733 = vadd.xlane.f32.xlu0 %v732
      %v734 = vpop.xlane.xlu0 %733
      %v735 = vsel %vm632, %v702, 0.0
      %736 = vadd.xlane.f32.xlu0 %v735
      %v737 = vpop.xlane.xlu0 %736
      %v738 = vsel %vm632, %v704, 0.0
      %739 = vadd.xlane.f32.xlu0 %v738
      %v740 = vpop.xlane.xlu0 %739
      %v741 = vrcp.pop %v707
      %v742 = vrcp.pop %v710
      %v743 = vrcp.pop %v713
      %v744 = vrcp.pop %v716
      %v745 = vrcp.pop %v719
      %v746 = vrcp.pop %v722
      %v747 = vrcp.pop %v725
      %v748 = vrcp.pop %v728
      %v749 = vrcp.pop %v731
      %v750 = vrcp.pop %v734
      %v751 = vrcp.pop %v737
      %v752 = vrcp.pop %v740
      %v753 = vmul.f32 %v682, %v741
      %v754 = vmul.f32 %v684, %v742
      %v755 = vmul.f32 %v686, %v743
      %v756 = vmul.f32 %v688, %v744
      %v757 = vmul.f32 %v690, %v745
      %v758 = vmul.f32 %v692, %v746
      %v759 = vmul.f32 %v694, %v747
      %v760 = vmul.f32 %v696, %v748
      %v761 = vmul.f32 %v698, %v749
      %v762 = vmul.f32 %v700, %v750
      %v763 = vmul.f32 %v702, %v751
      %v764 = vmul.f32 %v704, %v752
      %v765 = vpack.c.bf16 %v753, %v753
      %v766 = vpack.c.bf16 %v754, %v754
      %v767 = vpack.c.bf16 %v755, %v755
      %v768 = vpack.c.bf16 %v756, %v756
      %v769 = vpack.c.bf16 %v757, %v757
      %v770 = vpack.c.bf16 %v758, %v758
      %v771 = vpack.c.bf16 %v759, %v759
      %v772 = vpack.c.bf16 %v760, %v760
      %v773 = vpack.c.bf16 %v761, %v761
      %v774 = vpack.c.bf16 %v762, %v762
      %v775 = vpack.c.bf16 %v763, %v763
      %v776 = vpack.c.bf16 %v764, %v764
      %v780 = vunpack.c.l.b16 %v765
      %v781 = vunpack.c.l.b16 %v766
      %v782 = vunpack.c.l.b16 %v767
      %v783 = vpack.c.b16 %v781, %v780
      %v784 = vpack.c.b16 %v782, %v782
      %785 = vrot.lane.b32.xlu0 %v482, 64
      %v786 = vpop.permute.xlu0 %785
      %787 = vrot.lane.b32.xlu0 %v483, 64
      %v788 = vpop.permute.xlu0 %787
      %v791 = vsel %vm632, %v783, 0
      %v794 = vsel %vm632, %v784, 0
      %v797 = vsel %vm194, %v788, 0
      %799 = vmatpush.bf16.msra.mxu0 0
      %800 = vmatpush.bf16.msra.mxu0 0
      %801 = vmatpush.bf16.msra.mxu0 0
      %802 = vmatpush.bf16.msra.mxu0 0
      %803 = vmatpush.bf16.msra.mxu0 0
      %804 = vmatpush.bf16.msra.mxu0 0
      %805 = vmatpush.bf16.msra.mxu0 %v797
      %806 = vmatpush.bf16.msra.mxu0 %v786
      %807 = vmatmul.bf16.gmra.mxu0 %v791
      %v808 = vpop.f32.mrf.mxu0
      %v809 = vadd.f32 0.0, %v808
      %v810 = vpop.f32.mrf.mxu0
      %v811 = vadd.f32 0.0, %v810
      %812 = vmatmul.bf16.gmra.mxu0 %v794
      %v813 = vpop.f32.mrf.mxu0
      %v814 = vadd.f32 0.0, %v813
      %v815 = vpop.f32.mrf.mxu0
      %816 = vdwg.mxu0
      %v817 = vpack.c.bf16 %v811, %v809
      %v818 = vpack.c.bf16 %v814, %v814
      %v822 = vunpack.c.l.b16 %v768
      %v823 = vunpack.c.l.b16 %v769
      %v824 = vunpack.c.l.b16 %v770
      %v825 = vpack.c.b16 %v823, %v822
      %v826 = vpack.c.b16 %v824, %v824
      %827 = vrot.lane.b32.xlu0 %v482, 56
      %v828 = vpop.permute.xlu0 %827
      %829 = vrot.lane.b32.xlu0 %v483, 56
      %v830 = vpop.permute.xlu0 %829
      %v833 = vsel %vm632, %v825, 0
      %v836 = vsel %vm632, %v826, 0
      %v839 = vsel %vm194, %v830, 0
      %841 = vmatpush.bf16.msra.mxu0 0
      %842 = vmatpush.bf16.msra.mxu0 0
      %843 = vmatpush.bf16.msra.mxu0 0
      %844 = vmatpush.bf16.msra.mxu0 0
      %845 = vmatpush.bf16.msra.mxu0 0
      %846 = vmatpush.bf16.msra.mxu0 0
      %847 = vmatpush.bf16.msra.mxu0 %v839
      %848 = vmatpush.bf16.msra.mxu0 %v828
      %849 = vmatmul.bf16.gmra.mxu0 %v833
      %v850 = vpop.f32.mrf.mxu0
      %v851 = vadd.f32 0.0, %v850
      %v852 = vpop.f32.mrf.mxu0
      %v853 = vadd.f32 0.0, %v852
      %854 = vmatmul.bf16.gmra.mxu0 %v836
      %v855 = vpop.f32.mrf.mxu0
      %v856 = vadd.f32 0.0, %v855
      %v857 = vpop.f32.mrf.mxu0
      %858 = vdwg.mxu0
      %v859 = vpack.c.bf16 %v853, %v851
      %v860 = vpack.c.bf16 %v856, %v856
      %v861 = vpack.c.b16 %v428, %v428
      %862 = vrot.lane.b32.xlu0 %v861, 32
      %v863 = vpop.permute.xlu0 %862
      %v865 = vsel %vm190, %v859, 0
      %v868 = vsel %vm190, %v860, 0
      %v871 = vsel %vm194, %v863, 0
      %873 = vmatpush.bf16.msra.mxu0 0
      %874 = vmatpush.bf16.msra.mxu0 0
      %875 = vmatpush.bf16.msra.mxu0 0
      %876 = vmatpush.bf16.msra.mxu0 0
      %877 = vmatpush.bf16.msra.mxu0 0
      %878 = vmatpush.bf16.msra.mxu0 0
      %879 = vmatpush.bf16.msra.mxu0 0
      %880 = vmatpush.bf16.msra.mxu0 %v871
      %881 = vmatmul.bf16.gmra.mxu0 %v865
      %v882 = vpop.f32.mrf.mxu0
      %v883 = vadd.f32 0.0, %v882
      %v884 = vpop.f32.mrf.mxu0
      %v885 = vadd.f32 0.0, %v884
      %886 = vmatmul.bf16.gmra.mxu0 %v868
      %v887 = vpop.f32.mrf.mxu0
      %v888 = vadd.f32 0.0, %v887
      %v889 = vpop.f32.mrf.mxu0
      %890 = vdwg.mxu0
      %v891 = vpack.c.b16 %v427, %v427
      %892 = vrot.lane.b32.xlu0 %v891, 32
      %v893 = vpop.permute.xlu0 %892
      %v895 = vsel %vm190, %v817, 0
      %v898 = vsel %vm190, %v818, 0
      %v901 = vsel %vm194, %v893, 0
      %903 = vmatpush.bf16.msra.mxu0 0
      %904 = vmatpush.bf16.msra.mxu0 0
      %905 = vmatpush.bf16.msra.mxu0 0
      %906 = vmatpush.bf16.msra.mxu0 0
      %907 = vmatpush.bf16.msra.mxu0 0
      %908 = vmatpush.bf16.msra.mxu0 0
      %909 = vmatpush.bf16.msra.mxu0 0
      %910 = vmatpush.bf16.msra.mxu0 %v901
      %911 = vmatmul.bf16.gmra.mxu0 %v895
      %v912 = vpop.f32.mrf.mxu0
      %v913 = vadd.f32 %v883, %v912
      %v914 = vpop.f32.mrf.mxu0
      %v915 = vadd.f32 %v885, %v914
      %916 = vmatmul.bf16.gmra.mxu0 %v898
      %v917 = vpop.f32.mrf.mxu0
      %v918 = vadd.f32 %v888, %v917
      %v919 = vpop.f32.mrf.mxu0
      %920 = vdwg.mxu0
      %v924 = vunpack.c.l.b16 %v771
      %v925 = vunpack.c.l.b16 %v772
      %v926 = vunpack.c.l.b16 %v773
      %v927 = vpack.c.b16 %v925, %v924
      %v928 = vpack.c.b16 %v926, %v926
      %929 = vrot.lane.b32.xlu0 %v482, 48
      %v930 = vpop.permute.xlu0 %929
      %931 = vrot.lane.b32.xlu0 %v483, 48
      %v932 = vpop.permute.xlu0 %931
      %v935 = vsel %vm632, %v927, 0
      %v938 = vsel %vm632, %v928, 0
      %v941 = vsel %vm194, %v932, 0
      %943 = vmatpush.bf16.msra.mxu0 0
      %944 = vmatpush.bf16.msra.mxu0 0
      %945 = vmatpush.bf16.msra.mxu0 0
      %946 = vmatpush.bf16.msra.mxu0 0
      %947 = vmatpush.bf16.msra.mxu0 0
      %948 = vmatpush.bf16.msra.mxu0 0
      %949 = vmatpush.bf16.msra.mxu0 %v941
      %950 = vmatpush.bf16.msra.mxu0 %v930
      %951 = vmatmul.bf16.gmra.mxu0 %v935
      %v952 = vpop.f32.mrf.mxu0
      %v953 = vadd.f32 0.0, %v952
      %v954 = vpop.f32.mrf.mxu0
      %v955 = vadd.f32 0.0, %v954
      %956 = vmatmul.bf16.gmra.mxu0 %v938
      %v957 = vpop.f32.mrf.mxu0
      %v958 = vadd.f32 0.0, %v957
      %v959 = vpop.f32.mrf.mxu0
      %960 = vdwg.mxu0
      %v961 = vpack.c.bf16 %v955, %v953
      %v962 = vpack.c.bf16 %v958, %v958
      %v963 = vpack.c.b16 %v429, %v429
      %964 = vrot.lane.b32.xlu0 %v963, 32
      %v965 = vpop.permute.xlu0 %964
      %v967 = vsel %vm190, %v961, 0
      %v970 = vsel %vm190, %v962, 0
      %v973 = vsel %vm194, %v965, 0
      %975 = vmatpush.bf16.msra.mxu0 0
      %976 = vmatpush.bf16.msra.mxu0 0
      %977 = vmatpush.bf16.msra.mxu0 0
      %978 = vmatpush.bf16.msra.mxu0 0
      %979 = vmatpush.bf16.msra.mxu0 0
      %980 = vmatpush.bf16.msra.mxu0 0
      %981 = vmatpush.bf16.msra.mxu0 0
      %982 = vmatpush.bf16.msra.mxu0 %v973
      %983 = vmatmul.bf16.gmra.mxu0 %v967
      %v984 = vpop.f32.mrf.mxu0
      %v985 = vadd.f32 0.0, %v984
      %v986 = vpop.f32.mrf.mxu0
      %v987 = vadd.f32 0.0, %v986
      %988 = vmatmul.bf16.gmra.mxu0 %v970
      %v989 = vpop.f32.mrf.mxu0
      %v990 = vadd.f32 0.0, %v989
      %v991 = vpop.f32.mrf.mxu0
      %992 = vdwg.mxu0
      %v993 = vadd.f32 %v913, %v985
      %v994 = vadd.f32 %v915, %v987
      %v995 = vadd.f32 %v918, %v990
      %v999 = vunpack.c.l.b16 %v774
      %v1000 = vunpack.c.l.b16 %v775
      %v1001 = vunpack.c.l.b16 %v776
      %v1002 = vpack.c.b16 %v1000, %v999
      %v1003 = vpack.c.b16 %v1001, %v1001
      %1004 = vrot.lane.b32.xlu0 %v482, 40
      %v1005 = vpop.permute.xlu0 %1004
      %1006 = vrot.lane.b32.xlu0 %v483, 40
      %v1007 = vpop.permute.xlu0 %1006
      %v1010 = vsel %vm632, %v1002, 0
      %v1013 = vsel %vm632, %v1003, 0
      %v1016 = vsel %vm194, %v1007, 0
      %1018 = vmatpush.bf16.msra.mxu0 0
      %1019 = vmatpush.bf16.msra.mxu0 0
      %1020 = vmatpush.bf16.msra.mxu0 0
      %1021 = vmatpush.bf16.msra.mxu0 0
      %1022 = vmatpush.bf16.msra.mxu0 0
      %1023 = vmatpush.bf16.msra.mxu0 0
      %1024 = vmatpush.bf16.msra.mxu0 %v1016
      %1025 = vmatpush.bf16.msra.mxu0 %v1005
      %1026 = vmatmul.bf16.gmra.mxu0 %v1010
      %v1027 = vpop.f32.mrf.mxu0
      %v1028 = vadd.f32 0.0, %v1027
      %v1029 = vpop.f32.mrf.mxu0
      %v1030 = vadd.f32 0.0, %v1029
      %1031 = vmatmul.bf16.gmra.mxu0 %v1013
      %v1032 = vpop.f32.mrf.mxu0
      %v1033 = vadd.f32 0.0, %v1032
      %v1034 = vpop.f32.mrf.mxu0
      %1035 = vdwg.mxu0
      %v1036 = vpack.c.bf16 %v1030, %v1028
      %v1037 = vpack.c.bf16 %v1033, %v1033
      %v1038 = vpack.c.b16 %v430, %v430
      %1039 = vrot.lane.b32.xlu0 %v1038, 32
      %v1040 = vpop.permute.xlu0 %1039
      %v1042 = vsel %vm190, %v1036, 0
      %v1045 = vsel %vm190, %v1037, 0
      %v1048 = vsel %vm194, %v1040, 0
      %1050 = vmatpush.bf16.msra.mxu0 0
      %1051 = vmatpush.bf16.msra.mxu0 0
      %1052 = vmatpush.bf16.msra.mxu0 0
      %1053 = vmatpush.bf16.msra.mxu0 0
      %1054 = vmatpush.bf16.msra.mxu0 0
      %1055 = vmatpush.bf16.msra.mxu0 0
      %1056 = vmatpush.bf16.msra.mxu0 0
      %1057 = vmatpush.bf16.msra.mxu0 %v1048
      %1058 = vmatmul.bf16.gmra.mxu0 %v1042
      %v1059 = vpop.f32.mrf.mxu0
      %v1060 = vadd.f32 0.0, %v1059
      %v1061 = vpop.f32.mrf.mxu0
      %v1062 = vadd.f32 0.0, %v1061
      %1063 = vmatmul.bf16.gmra.mxu0 %v1045
      %v1064 = vpop.f32.mrf.mxu0
      %v1065 = vadd.f32 0.0, %v1064
      %v1066 = vpop.f32.mrf.mxu0
      %1067 = vdwg.mxu0
      %v1068 = vadd.f32 %v993, %v1060
      %v1069 = vadd.f32 %v994, %v1062
      %v1070 = vadd.f32 %v995, %v1065
      %v1071 = vadd.f32 %v212, %v1068
      %v1072 = vadd.f32 %v326, %v1069
      %v1073 = vadd.f32 %v327, %v1070
      %v1074 = vperm.slane %v177, 3
      %v1075 = vadd.f32 %v1071, %v1074
      %v1076 = vadd.f32 %v1072, %v1074
      %v1077 = vadd.f32 %v1073, %v1074
      %v1078 = vsel %vm332, %v1075, 0.0
      %1079 = vadd.xlane.f32.xlu0 %v1078
      %v1080 = vpop.xlane.xlu0 %1079
      %v1081 = vsel %vm332, %v1076, 0.0
      %1082 = vadd.xlane.f32.xlu0 %v1081
      %v1083 = vpop.xlane.xlu0 %1082
      %v1084 = vsel %vm332, %v1077, 0.0
      %1085 = vadd.xlane.f32.xlu0 %v1084
      %v1086 = vpop.xlane.xlu0 %1085
      %v1087 = vmul.f32 %v1080, %v348
      %v1088 = vmul.f32 %v1083, %v348
      %v1089 = vmul.f32 %v1086, %v348
      %v1090 = vmul.f32 %v1075, %v1075
      %v1091 = vmul.f32 %v1076, %v1076
      %v1092 = vmul.f32 %v1077, %v1077
      %v1093 = vsel %vm332, %v1090, 0.0
      %1094 = vadd.xlane.f32.xlu0 %v1093
      %v1095 = vpop.xlane.xlu0 %1094
      %v1096 = vsel %vm332, %v1091, 0.0
      %1097 = vadd.xlane.f32.xlu0 %v1096
      %v1098 = vpop.xlane.xlu0 %1097
      %v1099 = vsel %vm332, %v1092, 0.0
      %1100 = vadd.xlane.f32.xlu0 %v1099
      %v1101 = vpop.xlane.xlu0 %1100
      %v1102 = vmul.f32 %v1095, %v348
      %v1103 = vmul.f32 %v1098, %v348
      %v1104 = vmul.f32 %v1101, %v348
      %v1105 = vmul.f32 %v1087, %v1087
      %v1106 = vmul.f32 %v1088, %v1088
      %v1107 = vmul.f32 %v1089, %v1089
      %v1108 = vsub.f32 %v1102, %v1105
      %v1109 = vsub.f32 %v1103, %v1106
      %v1110 = vsub.f32 %v1104, %v1107
      %v1111 = vsub.f32 %v1075, %v1087
      %v1112 = vsub.f32 %v1076, %v1088
      %v1113 = vsub.f32 %v1077, %v1089
      %v1114 = vadd.f32 %v1108, 1e-05
      %v1115 = vadd.f32 %v1109, 1e-05
      %v1116 = vadd.f32 %v1110, 1e-05
      %v1117 = vrsqrt.pop %v1114
      %v1118 = vmul.f32 %v1117, %v1114
      %v1119 = vmul.f32 %v1118, %v1117
      %v1120 = vmul.f32 0.5, %v1119
      %v1121 = vsub.f32 1.5, %v1120
      %v1122 = vmul.f32 %v1117, %v1121
      %vm1123 = vweird.f32 %v1114
      %vm1124 = vweird.f32 %v1117
      %vm1125 = vmor %vm1123, %vm1124
      %v1126 = vsel %vm1125, %v1117, %v1122
      %v1127 = vrsqrt.pop %v1115
      %v1128 = vmul.f32 %v1127, %v1115
      %v1129 = vmul.f32 %v1128, %v1127
      %v1130 = vmul.f32 0.5, %v1129
      %v1131 = vsub.f32 1.5, %v1130
      %v1132 = vmul.f32 %v1127, %v1131
      %vm1133 = vweird.f32 %v1115
      %vm1134 = vweird.f32 %v1127
      %vm1135 = vmor %vm1133, %vm1134
      %v1136 = vsel %vm1135, %v1127, %v1132
      %v1137 = vrsqrt.pop %v1116
      %v1138 = vmul.f32 %v1137, %v1116
      %v1139 = vmul.f32 %v1138, %v1137
      %v1140 = vmul.f32 0.5, %v1139
      %v1141 = vsub.f32 1.5, %v1140
      %v1142 = vmul.f32 %v1137, %v1141
      %vm1143 = vweird.f32 %v1116
      %vm1144 = vweird.f32 %v1137
      %vm1145 = vmor %vm1143, %vm1144
      %v1146 = vsel %vm1145, %v1137, %v1142
      %v1147 = vmul.f32 %v1111, %v1126
      %v1148 = vmul.f32 %v1112, %v1136
      %v1149 = vmul.f32 %v1113, %v1146
      %v1150 = vperm.slane %v177, 4
      %v1151 = vmul.f32 %v1147, %v1150
      %v1152 = vmul.f32 %v1148, %v1150
      %v1153 = vmul.f32 %v1149, %v1150
      %v1154 = vperm.slane %v177, 5
      %v1155 = vadd.f32 %v1151, %v1154
      %v1156 = vadd.f32 %v1152, %v1154
      %v1157 = vadd.f32 %v1153, %v1154
      %v1158 = vpack.c.bf16 %v1156, %v1155
      %v1159 = vpack.c.bf16 %v1157, %v1157
      %v1160 = vperm.slane %v177, 6
      %v1161 = vunpack.c.h.b16 %v328
      %v1162 = vunpack.c.h.b16 %v329
      %v1163 = vunpack.c.h.b16 %v330
      %v1164 = vunpack.c.h.b16 %v331
      %v1165 = vpack.c.b16 %v1162, %v1161
      %v1166 = vpack.c.b16 %v1164, %v1163
      %v1170 = vsel %vm332, %v1158, 0
      %v1173 = vsel %vm332, %v1159, 0
      %1175 = vmatpush.bf16.msra.mxu0 0
      %1176 = vmatpush.bf16.msra.mxu0 0
      %1177 = vmatpush.bf16.msra.mxu0 0
      %1178 = vmatpush.bf16.msra.mxu0 0
      %1179 = vmatpush.bf16.msra.mxu0 0
      %1180 = vmatpush.bf16.msra.mxu0 0
      %1181 = vmatpush.bf16.msra.mxu0 %v1166
      %1182 = vmatpush.bf16.msra.mxu0 %v1165
      %1183 = vmatmul.bf16.gmra.mxu0 %v1170
      %v1184 = vpop.f32.mrf.mxu0
      %v1185 = vadd.f32 %v1160, %v1184
      %v1186 = vpop.f32.mrf.mxu0
      %v1187 = vadd.f32 %v1160, %v1186
      %1188 = vmatmul.bf16.gmra.mxu0 %v1173
      %v1189 = vpop.f32.mrf.mxu0
      %v1190 = vadd.f32 %v1160, %v1189
      %v1191 = vpop.f32.mrf.mxu0
      %1192 = vdwg.mxu0
      %v1193 = vmul.f32 %v1185, %v1185
      %v1194 = vmul.f32 %v1187, %v1187
      %v1195 = vmul.f32 %v1190, %v1190
      %v1196 = vmul.f32 %v1185, %v1193
      %v1197 = vmul.f32 %v1187, %v1194
      %v1198 = vmul.f32 %v1190, %v1195
      %v1199 = vmul.f32 %v1196, 0.044715
      %v1200 = vmul.f32 %v1197, 0.044715
      %v1201 = vmul.f32 %v1198, 0.044715
      %v1202 = vadd.f32 %v1185, %v1199
      %v1203 = vadd.f32 %v1187, %v1200
      %v1204 = vadd.f32 %v1190, %v1201
      %v1205 = vmul.f32 %v1202, 0.7978846
      %v1206 = vmul.f32 %v1203, 0.7978846
      %v1207 = vmul.f32 %v1204, 0.7978846
      %v1208 = vtanh.pop %v1205
      %v1209 = vtanh.pop %v1206
      %v1210 = vtanh.pop %v1207
      %v1211 = vadd.f32 %v1208, 1.0
      %v1212 = vadd.f32 %v1209, 1.0
      %v1213 = vadd.f32 %v1210, 1.0
      %v1214 = vmul.f32 %v1211, 0.5
      %v1215 = vmul.f32 %v1212, 0.5
      %v1216 = vmul.f32 %v1213, 0.5
      %v1217 = vmul.f32 %v1185, %v1214
      %v1218 = vmul.f32 %v1187, %v1215
      %v1219 = vmul.f32 %v1190, %v1216
      %v1220 = vpack.c.bf16 %v1218, %v1217
      %v1221 = vpack.c.bf16 %v1219, %v1219
      %v1222 = vperm.slane %v177, 7
      %1223 = vrot.lane.b32.xlu0 %v1165, 64
      %v1224 = vpop.permute.xlu0 %1223
      %1225 = vrot.lane.b32.xlu0 %v1166, 64
      %v1226 = vpop.permute.xlu0 %1225
      %vm1227 = vcmask 523264
      %v1229 = vsel %vm1227, %v1220, 0
      %v1232 = vsel %vm1227, %v1221, 0
      %v1235 = vsel %vm1227, %v1224, 0
      %v1238 = vsel %vm1227, %v1226, 0
      %1240 = vmatpush.bf16.xpose.msra.mxu0 0
      %1241 = vmatpush.bf16.xpose.msra.mxu0 0
      %1242 = vmatpush.bf16.xpose.msra.mxu0 0
      %1243 = vmatpush.bf16.xpose.msra.mxu0 0
      %1244 = vmatpush.bf16.xpose.msra.mxu0 0
      %1245 = vmatpush.bf16.xpose.msra.mxu0 0
      %1246 = vmatpush.bf16.xpose.msra.mxu0 %v1238
      %1247 = vmatpush.bf16.xpose.msra.mxu0 %v1235
      %1248 = vmatmul.bf16.gmra.mxu0 %v1229
      %v1249 = vpop.f32.mrf.mxu0
      %v1250 = vadd.f32 %v1222, %v1249
      %v1251 = vpop.f32.mrf.mxu0
      %v1252 = vadd.f32 %v1222, %v1251
      %1253 = vmatmul.bf16.gmra.mxu0 %v1232
      %v1254 = vpop.f32.mrf.mxu0
      %v1255 = vadd.f32 %v1222, %v1254
      %v1256 = vpop.f32.mrf.mxu0
      %1257 = vdwg.mxu0
      %v1258 = vadd.f32 %v1075, %v1250
      %v1259 = vadd.f32 %v1076, %v1252
      %v1260 = vadd.f32 %v1077, %v1255
      %s1261 = scalar_lea.vmem %s2, 32
      %v1262 = vld [vmem:[%s1261] sm:$0xff]
      %v1263 = vld [vmem:[%s1261 + $0x8] sm:$0xff]
      %v1264 = vld [vmem:[%s1261 + $0x10] sm:$0xff]
      %v1265 = vld [vmem:[%s1261 + $0x18] sm:$0xff]
      %v1266 = vsel %vm332, %v1258, 0.0
      %1267 = vadd.xlane.f32.xlu0 %v1266
      %v1268 = vpop.xlane.xlu0 %1267
      %v1269 = vsel %vm332, %v1259, 0.0
      %1270 = vadd.xlane.f32.xlu0 %v1269
      %v1271 = vpop.xlane.xlu0 %1270
      %v1272 = vsel %vm332, %v1260, 0.0
      %1273 = vadd.xlane.f32.xlu0 %v1272
      %v1274 = vpop.xlane.xlu0 %1273
      %v1275 = vmul.f32 %v1268, %v348
      %v1276 = vmul.f32 %v1271, %v348
      %v1277 = vmul.f32 %v1274, %v348
      %v1278 = vmul.f32 %v1258, %v1258
      %v1279 = vmul.f32 %v1259, %v1259
      %v1280 = vmul.f32 %v1260, %v1260
      %v1281 = vsel %vm332, %v1278, 0.0
      %1282 = vadd.xlane.f32.xlu0 %v1281
      %v1283 = vpop.xlane.xlu0 %1282
      %v1284 = vsel %vm332, %v1279, 0.0
      %1285 = vadd.xlane.f32.xlu0 %v1284
      %v1286 = vpop.xlane.xlu0 %1285
      %v1287 = vsel %vm332, %v1280, 0.0
      %1288 = vadd.xlane.f32.xlu0 %v1287
      %v1289 = vpop.xlane.xlu0 %1288
      %v1290 = vmul.f32 %v1283, %v348
      %v1291 = vmul.f32 %v1286, %v348
      %v1292 = vmul.f32 %v1289, %v348
      %v1293 = vmul.f32 %v1275, %v1275
      %v1294 = vmul.f32 %v1276, %v1276
      %v1295 = vmul.f32 %v1277, %v1277
      %v1296 = vsub.f32 %v1290, %v1293
      %v1297 = vsub.f32 %v1291, %v1294
      %v1298 = vsub.f32 %v1292, %v1295
      %v1299 = vsub.f32 %v1258, %v1275
      %v1300 = vsub.f32 %v1259, %v1276
      %v1301 = vsub.f32 %v1260, %v1277
      %v1302 = vadd.f32 %v1296, 1e-05
      %v1303 = vadd.f32 %v1297, 1e-05
      %v1304 = vadd.f32 %v1298, 1e-05
      %v1305 = vrsqrt.pop %v1302
      %v1306 = vmul.f32 %v1305, %v1302
      %v1307 = vmul.f32 %v1306, %v1305
      %v1308 = vmul.f32 0.5, %v1307
      %v1309 = vsub.f32 1.5, %v1308
      %v1310 = vmul.f32 %v1305, %v1309
      %vm1311 = vweird.f32 %v1302
      %vm1312 = vweird.f32 %v1305
      %vm1313 = vmor %vm1311, %vm1312
      %v1314 = vsel %vm1313, %v1305, %v1310
      %v1315 = vrsqrt.pop %v1303
      %v1316 = vmul.f32 %v1315, %v1303
      %v1317 = vmul.f32 %v1316, %v1315
      %v1318 = vmul.f32 0.5, %v1317
      %v1319 = vsub.f32 1.5, %v1318
      %v1320 = vmul.f32 %v1315, %v1319
      %vm1321 = vweird.f32 %v1303
      %vm1322 = vweird.f32 %v1315
      %vm1323 = vmor %vm1321, %vm1322
      %v1324 = vsel %vm1323, %v1315, %v1320
      %v1325 = vrsqrt.pop %v1304
      %v1326 = vmul.f32 %v1325, %v1304
      %v1327 = vmul.f32 %v1326, %v1325
      %v1328 = vmul.f32 0.5, %v1327
      %v1329 = vsub.f32 1.5, %v1328
      %v1330 = vmul.f32 %v1325, %v1329
      %vm1331 = vweird.f32 %v1304
      %vm1332 = vweird.f32 %v1325
      %vm1333 = vmor %vm1331, %vm1332
      %v1334 = vsel %vm1333, %v1325, %v1330
      %v1335 = vmul.f32 %v1299, %v1314
      %v1336 = vmul.f32 %v1300, %v1324
      %v1337 = vmul.f32 %v1301, %v1334
      %v1338 = vperm.slane %v178, 0
      %v1339 = vmul.f32 %v1335, %v1338
      %v1340 = vmul.f32 %v1336, %v1338
      %v1341 = vmul.f32 %v1337, %v1338
      %v1342 = vperm.slane %v178, 1
      %v1343 = vadd.f32 %v1339, %v1342
      %v1344 = vadd.f32 %v1340, %v1342
      %v1345 = vadd.f32 %v1341, %v1342
      %v1346 = vpack.c.bf16 %v1344, %v1343
      %v1347 = vpack.c.bf16 %v1345, %v1345
      %v1348 = vperm.slane %v178, 2
      %v1353 = vunpack.c.l.b16 %v1262
      %v1354 = vunpack.c.l.b16 %v1263
      %v1355 = vunpack.c.l.b16 %v1264
      %v1356 = vunpack.c.l.b16 %v1265
      %v1357 = vpack.c.b16 %v1354, %v1353
      %v1358 = vpack.c.b16 %v1356, %v1355
      %v1362 = vsel %vm332, %v1346, 0
      %v1365 = vsel %vm332, %v1347, 0
      %1367 = vmatpush.bf16.msra.mxu0 0
      %1368 = vmatpush.bf16.msra.mxu0 0
      %1369 = vmatpush.bf16.msra.mxu0 0
      %1370 = vmatpush.bf16.msra.mxu0 0
      %1371 = vmatpush.bf16.msra.mxu0 0
      %1372 = vmatpush.bf16.msra.mxu0 0
      %1373 = vmatpush.bf16.msra.mxu0 %v1358
      %1374 = vmatpush.bf16.msra.mxu0 %v1357
      %1375 = vmatmul.bf16.gmra.mxu0 %v1362
      %v1376 = vpop.f32.mrf.mxu0
      %v1377 = vadd.f32 %v1348, %v1376
      %v1378 = vpop.f32.mrf.mxu0
      %v1379 = vadd.f32 %v1348, %v1378
      %1380 = vmatmul.bf16.gmra.mxu0 %v1365
      %v1381 = vpop.f32.mrf.mxu0
      %v1382 = vadd.f32 %v1348, %v1381
      %v1383 = vpop.f32.mrf.mxu0
      %1384 = vdwg.mxu0
      %v1385 = vmul.f32 %v1377, 0.35355338
      %v1386 = vmul.f32 %v1379, 0.35355338
      %v1387 = vmul.f32 %v1382, 0.35355338
      %v1388 = vpack.c.bf16 %v1385, %v1385
      %v1389 = vpack.c.bf16 %v1386, %v1386
      %v1390 = vpack.c.bf16 %v1387, %v1387
      %v1391 = vpack.c.bf16 %v1377, %v1377
      %v1392 = vpack.c.bf16 %v1379, %v1379
      %v1393 = vpack.c.bf16 %v1382, %v1382
      %v1397 = vunpack.c.l.b16 %v1388
      %v1398 = vunpack.c.l.b16 %v1389
      %v1399 = vunpack.c.l.b16 %v1390
      %v1400 = vpack.c.b16 %v1398, %v1397
      %v1401 = vpack.c.b16 %v1399, %v1399
      %v1405 = vunpack.c.l.b16 %v1391
      %v1406 = vunpack.c.l.b16 %v1392
      %v1407 = vunpack.c.l.b16 %v1393
      %v1408 = vpack.c.b16 %v1406, %v1405
      %v1409 = vpack.c.b16 %v1407, %v1407
      %1410 = vrot.lane.b32.xlu0 %v1408, 96
      %v1411 = vpop.permute.xlu0 %1410
      %1412 = vrot.lane.b32.xlu0 %v1409, 96
      %v1413 = vpop.permute.xlu0 %1412
      %v1415 = vsel %vm190, %v1400, 0
      %v1418 = vsel %vm190, %v1401, 0
      %v1421 = vsel %vm190, %v1411, 0
      %v1424 = vsel %vm190, %v1413, 0
      %1426 = vmatpush.bf16.xpose.msra.mxu0 0
      %1427 = vmatpush.bf16.xpose.msra.mxu0 0
      %1428 = vmatpush.bf16.xpose.msra.mxu0 0
      %1429 = vmatpush.bf16.xpose.msra.mxu0 0
      %1430 = vmatpush.bf16.xpose.msra.mxu0 0
      %1431 = vmatpush.bf16.xpose.msra.mxu0 0
      %1432 = vmatpush.bf16.xpose.msra.mxu0 %v1424
      %1433 = vmatpush.bf16.xpose.msra.mxu0 %v1421
      %1434 = vmatmul.bf16.gmra.mxu0 %v1415
      %v1435 = vpop.f32.mrf.mxu0
      %v1436 = vadd.f32 0.0, %v1435
      %v1437 = vpop.f32.mrf.mxu0
      %v1438 = vadd.f32 0.0, %v1437
      %1439 = vmatmul.bf16.gmra.mxu0 %v1418
      %v1440 = vpop.f32.mrf.mxu0
      %v1441 = vadd.f32 0.0, %v1440
      %v1442 = vpop.f32.mrf.mxu0
      %1443 = vdwg.mxu0
      %1444 = vrot.lane.b32.xlu0 %v1400, 120
      %v1445 = vpop.permute.xlu0 %1444
      %1446 = vrot.lane.b32.xlu0 %v1401, 120
      %v1447 = vpop.permute.xlu0 %1446
      %1448 = vrot.lane.b32.xlu0 %v1408, 88
      %v1449 = vpop.permute.xlu0 %1448
      %1450 = vrot.lane.b32.xlu0 %v1409, 88
      %v1451 = vpop.permute.xlu0 %1450
      %v1453 = vsel %vm190, %v1445, 0
      %v1456 = vsel %vm190, %v1447, 0
      %v1459 = vsel %vm190, %v1449, 0
      %v1462 = vsel %vm190, %v1451, 0
      %1464 = vmatpush.bf16.xpose.msra.mxu0 0
      %1465 = vmatpush.bf16.xpose.msra.mxu0 0
      %1466 = vmatpush.bf16.xpose.msra.mxu0 0
      %1467 = vmatpush.bf16.xpose.msra.mxu0 0
      %1468 = vmatpush.bf16.xpose.msra.mxu0 0
      %1469 = vmatpush.bf16.xpose.msra.mxu0 0
      %1470 = vmatpush.bf16.xpose.msra.mxu0 %v1462
      %1471 = vmatpush.bf16.xpose.msra.mxu0 %v1459
      %1472 = vmatmul.bf16.gmra.mxu0 %v1453
      %v1473 = vpop.f32.mrf.mxu0
      %v1474 = vadd.f32 0.0, %v1473
      %v1475 = vpop.f32.mrf.mxu0
      %v1476 = vadd.f32 0.0, %v1475
      %1477 = vmatmul.bf16.gmra.mxu0 %v1456
      %v1478 = vpop.f32.mrf.mxu0
      %v1479 = vadd.f32 0.0, %v1478
      %v1480 = vpop.f32.mrf.mxu0
      %1481 = vdwg.mxu0
      %1482 = vrot.lane.b32.xlu0 %v1400, 112
      %v1483 = vpop.permute.xlu0 %1482
      %1484 = vrot.lane.b32.xlu0 %v1401, 112
      %v1485 = vpop.permute.xlu0 %1484
      %1486 = vrot.lane.b32.xlu0 %v1408, 80
      %v1487 = vpop.permute.xlu0 %1486
      %1488 = vrot.lane.b32.xlu0 %v1409, 80
      %v1489 = vpop.permute.xlu0 %1488
      %v1491 = vsel %vm190, %v1483, 0
      %v1494 = vsel %vm190, %v1485, 0
      %v1497 = vsel %vm190, %v1487, 0
      %v1500 = vsel %vm190, %v1489, 0
      %1502 = vmatpush.bf16.xpose.msra.mxu0 0
      %1503 = vmatpush.bf16.xpose.msra.mxu0 0
      %1504 = vmatpush.bf16.xpose.msra.mxu0 0
      %1505 = vmatpush.bf16.xpose.msra.mxu0 0
      %1506 = vmatpush.bf16.xpose.msra.mxu0 0
      %1507 = vmatpush.bf16.xpose.msra.mxu0 0
      %1508 = vmatpush.bf16.xpose.msra.mxu0 %v1500
      %1509 = vmatpush.bf16.xpose.msra.mxu0 %v1497
      %1510 = vmatmul.bf16.gmra.mxu0 %v1491
      %v1511 = vpop.f32.mrf.mxu0
      %v1512 = vadd.f32 0.0, %v1511
      %v1513 = vpop.f32.mrf.mxu0
      %v1514 = vadd.f32 0.0, %v1513
      %1515 = vmatmul.bf16.gmra.mxu0 %v1494
      %v1516 = vpop.f32.mrf.mxu0
      %v1517 = vadd.f32 0.0, %v1516
      %v1518 = vpop.f32.mrf.mxu0
      %1519 = vdwg.mxu0
      %1520 = vrot.lane.b32.xlu0 %v1400, 104
      %v1521 = vpop.permute.xlu0 %1520
      %1522 = vrot.lane.b32.xlu0 %v1401, 104
      %v1523 = vpop.permute.xlu0 %1522
      %1524 = vrot.lane.b32.xlu0 %v1408, 72
      %v1525 = vpop.permute.xlu0 %1524
      %1526 = vrot.lane.b32.xlu0 %v1409, 72
      %v1527 = vpop.permute.xlu0 %1526
      %v1529 = vsel %vm190, %v1521, 0
      %v1532 = vsel %vm190, %v1523, 0
      %v1535 = vsel %vm190, %v1525, 0
      %v1538 = vsel %vm190, %v1527, 0
      %1540 = vmatpush.bf16.xpose.msra.mxu0 0
      %1541 = vmatpush.bf16.xpose.msra.mxu0 0
      %1542 = vmatpush.bf16.xpose.msra.mxu0 0
      %1543 = vmatpush.bf16.xpose.msra.mxu0 0
      %1544 = vmatpush.bf16.xpose.msra.mxu0 0
      %1545 = vmatpush.bf16.xpose.msra.mxu0 0
      %1546 = vmatpush.bf16.xpose.msra.mxu0 %v1538
      %1547 = vmatpush.bf16.xpose.msra.mxu0 %v1535
      %1548 = vmatmul.bf16.gmra.mxu0 %v1529
      %v1549 = vpop.f32.mrf.mxu0
      %v1550 = vadd.f32 0.0, %v1549
      %v1551 = vpop.f32.mrf.mxu0
      %v1552 = vadd.f32 0.0, %v1551
      %1553 = vmatmul.bf16.gmra.mxu0 %v1532
      %v1554 = vpop.f32.mrf.mxu0
      %v1555 = vadd.f32 0.0, %v1554
      %v1556 = vpop.f32.mrf.mxu0
      %1557 = vdwg.mxu0
      %v1558 = vsel %vm632, %v1436, -inf
      %1559 = vmax.xlane.f32.xlu0 %v1558
      %v1560 = vpop.xlane.xlu0 %1559
      %v1561 = vsel %vm632, %v1438, -inf
      %1562 = vmax.xlane.f32.xlu0 %v1561
      %v1563 = vpop.xlane.xlu0 %1562
      %v1564 = vsel %vm632, %v1441, -inf
      %1565 = vmax.xlane.f32.xlu0 %v1564
      %v1566 = vpop.xlane.xlu0 %1565
      %v1567 = vsel %vm632, %v1474, -inf
      %1568 = vmax.xlane.f32.xlu0 %v1567
      %v1569 = vpop.xlane.xlu0 %1568
      %v1570 = vsel %vm632, %v1476, -inf
      %1571 = vmax.xlane.f32.xlu0 %v1570
      %v1572 = vpop.xlane.xlu0 %1571
      %v1573 = vsel %vm632, %v1479, -inf
      %1574 = vmax.xlane.f32.xlu0 %v1573
      %v1575 = vpop.xlane.xlu0 %1574
      %v1576 = vsel %vm632, %v1512, -inf
      %1577 = vmax.xlane.f32.xlu0 %v1576
      %v1578 = vpop.xlane.xlu0 %1577
      %v1579 = vsel %vm632, %v1514, -inf
      %1580 = vmax.xlane.f32.xlu0 %v1579
      %v1581 = vpop.xlane.xlu0 %1580
      %v1582 = vsel %vm632, %v1517, -inf
      %1583 = vmax.xlane.f32.xlu0 %v1582
      %v1584 = vpop.xlane.xlu0 %1583
      %v1585 = vsel %vm632, %v1550, -inf
      %1586 = vmax.xlane.f32.xlu0 %v1585
      %v1587 = vpop.xlane.xlu0 %1586
      %v1588 = vsel %vm632, %v1552, -inf
      %1589 = vmax.xlane.f32.xlu0 %v1588
      %v1590 = vpop.xlane.xlu0 %1589
      %v1591 = vsel %vm632, %v1555, -inf
      %1592 = vmax.xlane.f32.xlu0 %v1591
      %v1593 = vpop.xlane.xlu0 %1592
      %v1594 = vsub.f32 %v1436, %v1560
      %v1595 = vsub.f32 %v1438, %v1563
      %v1596 = vsub.f32 %v1441, %v1566
      %v1597 = vsub.f32 %v1474, %v1569
      %v1598 = vsub.f32 %v1476, %v1572
      %v1599 = vsub.f32 %v1479, %v1575
      %v1600 = vsub.f32 %v1512, %v1578
      %v1601 = vsub.f32 %v1514, %v1581
      %v1602 = vsub.f32 %v1517, %v1584
      %v1603 = vsub.f32 %v1550, %v1587
      %v1604 = vsub.f32 %v1552, %v1590
      %v1605 = vsub.f32 %v1555, %v1593
      %v1606 = vmul.f32 %v1594, 1.442695
      %v1607 = vpow.pop %v1606
      %v1608 = vmul.f32 %v1595, 1.442695
      %v1609 = vpow.pop %v1608
      %v1610 = vmul.f32 %v1596, 1.442695
      %v1611 = vpow.pop %v1610
      %v1612 = vmul.f32 %v1597, 1.442695
      %v1613 = vpow.pop %v1612
      %v1614 = vmul.f32 %v1598, 1.442695
      %v1615 = vpow.pop %v1614
      %v1616 = vmul.f32 %v1599, 1.442695
      %v1617 = vpow.pop %v1616
      %v1618 = vmul.f32 %v1600, 1.442695
      %v1619 = vpow.pop %v1618
      %v1620 = vmul.f32 %v1601, 1.442695
      %v1621 = vpow.pop %v1620
      %v1622 = vmul.f32 %v1602, 1.442695
      %v1623 = vpow.pop %v1622
      %v1624 = vmul.f32 %v1603, 1.442695
      %v1625 = vpow.pop %v1624
      %v1626 = vmul.f32 %v1604, 1.442695
      %v1627 = vpow.pop %v1626
      %v1628 = vmul.f32 %v1605, 1.442695
      %v1629 = vpow.pop %v1628
      %v1630 = vsel %vm632, %v1607, 0.0
      %1631 = vadd.xlane.f32.xlu0 %v1630
      %v1632 = vpop.xlane.xlu0 %1631
      %v1633 = vsel %vm632, %v1609, 0.0
      %1634 = vadd.xlane.f32.xlu0 %v1633
      %v1635 = vpop.xlane.xlu0 %1634
      %v1636 = vsel %vm632, %v1611, 0.0
      %1637 = vadd.xlane.f32.xlu0 %v1636
      %v1638 = vpop.xlane.xlu0 %1637
      %v1639 = vsel %vm632, %v1613, 0.0
      %1640 = vadd.xlane.f32.xlu0 %v1639
      %v1641 = vpop.xlane.xlu0 %1640
      %v1642 = vsel %vm632, %v1615, 0.0
      %1643 = vadd.xlane.f32.xlu0 %v1642
      %v1644 = vpop.xlane.xlu0 %1643
      %v1645 = vsel %vm632, %v1617, 0.0
      %1646 = vadd.xlane.f32.xlu0 %v1645
      %v1647 = vpop.xlane.xlu0 %1646
      %v1648 = vsel %vm632, %v1619, 0.0
      %1649 = vadd.xlane.f32.xlu0 %v1648
      %v1650 = vpop.xlane.xlu0 %1649
      %v1651 = vsel %vm632, %v1621, 0.0
      %1652 = vadd.xlane.f32.xlu0 %v1651
      %v1653 = vpop.xlane.xlu0 %1652
      %v1654 = vsel %vm632, %v1623, 0.0
      %1655 = vadd.xlane.f32.xlu0 %v1654
      %v1656 = vpop.xlane.xlu0 %1655
      %v1657 = vsel %vm632, %v1625, 0.0
      %1658 = vadd.xlane.f32.xlu0 %v1657
      %v1659 = vpop.xlane.xlu0 %1658
      %v1660 = vsel %vm632, %v1627, 0.0
      %1661 = vadd.xlane.f32.xlu0 %v1660
      %v1662 = vpop.xlane.xlu0 %1661
      %v1663 = vsel %vm632, %v1629, 0.0
      %1664 = vadd.xlane.f32.xlu0 %v1663
      %v1665 = vpop.xlane.xlu0 %1664
      %v1666 = vrcp.pop %v1632
      %v1667 = vrcp.pop %v1635
      %v1668 = vrcp.pop %v1638
      %v1669 = vrcp.pop %v1641
      %v1670 = vrcp.pop %v1644
      %v1671 = vrcp.pop %v1647
      %v1672 = vrcp.pop %v1650
      %v1673 = vrcp.pop %v1653
      %v1674 = vrcp.pop %v1656
      %v1675 = vrcp.pop %v1659
      %v1676 = vrcp.pop %v1662
      %v1677 = vrcp.pop %v1665
      %v1678 = vmul.f32 %v1607, %v1666
      %v1679 = vmul.f32 %v1609, %v1667
      %v1680 = vmul.f32 %v1611, %v1668
      %v1681 = vmul.f32 %v1613, %v1669
      %v1682 = vmul.f32 %v1615, %v1670
      %v1683 = vmul.f32 %v1617, %v1671
      %v1684 = vmul.f32 %v1619, %v1672
      %v1685 = vmul.f32 %v1621, %v1673
      %v1686 = vmul.f32 %v1623, %v1674
      %v1687 = vmul.f32 %v1625, %v1675
      %v1688 = vmul.f32 %v1627, %v1676
      %v1689 = vmul.f32 %v1629, %v1677
      %v1690 = vpack.c.bf16 %v1678, %v1678
      %v1691 = vpack.c.bf16 %v1679, %v1679
      %v1692 = vpack.c.bf16 %v1680, %v1680
      %v1693 = vpack.c.bf16 %v1681, %v1681
      %v1694 = vpack.c.bf16 %v1682, %v1682
      %v1695 = vpack.c.bf16 %v1683, %v1683
      %v1696 = vpack.c.bf16 %v1684, %v1684
      %v1697 = vpack.c.bf16 %v1685, %v1685
      %v1698 = vpack.c.bf16 %v1686, %v1686
      %v1699 = vpack.c.bf16 %v1687, %v1687
      %v1700 = vpack.c.bf16 %v1688, %v1688
      %v1701 = vpack.c.bf16 %v1689, %v1689
      %v1705 = vunpack.c.l.b16 %v1690
      %v1706 = vunpack.c.l.b16 %v1691
      %v1707 = vunpack.c.l.b16 %v1692
      %v1708 = vpack.c.b16 %v1706, %v1705
      %v1709 = vpack.c.b16 %v1707, %v1707
      %1710 = vrot.lane.b32.xlu0 %v1408, 64
      %v1711 = vpop.permute.xlu0 %1710
      %1712 = vrot.lane.b32.xlu0 %v1409, 64
      %v1713 = vpop.permute.xlu0 %1712
      %v1716 = vsel %vm632, %v1708, 0
      %v1719 = vsel %vm632, %v1709, 0
      %v1722 = vsel %vm194, %v1713, 0
      %1724 = vmatpush.bf16.msra.mxu0 0
      %1725 = vmatpush.bf16.msra.mxu0 0
      %1726 = vmatpush.bf16.msra.mxu0 0
      %1727 = vmatpush.bf16.msra.mxu0 0
      %1728 = vmatpush.bf16.msra.mxu0 0
      %1729 = vmatpush.bf16.msra.mxu0 0
      %1730 = vmatpush.bf16.msra.mxu0 %v1722
      %1731 = vmatpush.bf16.msra.mxu0 %v1711
      %1732 = vmatmul.bf16.gmra.mxu0 %v1716
      %v1733 = vpop.f32.mrf.mxu0
      %v1734 = vadd.f32 0.0, %v1733
      %v1735 = vpop.f32.mrf.mxu0
      %v1736 = vadd.f32 0.0, %v1735
      %1737 = vmatmul.bf16.gmra.mxu0 %v1719
      %v1738 = vpop.f32.mrf.mxu0
      %v1739 = vadd.f32 0.0, %v1738
      %v1740 = vpop.f32.mrf.mxu0
      %1741 = vdwg.mxu0
      %v1742 = vpack.c.bf16 %v1736, %v1734
      %v1743 = vpack.c.bf16 %v1739, %v1739
      %v1747 = vunpack.c.l.b16 %v1693
      %v1748 = vunpack.c.l.b16 %v1694
      %v1749 = vunpack.c.l.b16 %v1695
      %v1750 = vpack.c.b16 %v1748, %v1747
      %v1751 = vpack.c.b16 %v1749, %v1749
      %1752 = vrot.lane.b32.xlu0 %v1408, 56
      %v1753 = vpop.permute.xlu0 %1752
      %1754 = vrot.lane.b32.xlu0 %v1409, 56
      %v1755 = vpop.permute.xlu0 %1754
      %v1758 = vsel %vm632, %v1750, 0
      %v1761 = vsel %vm632, %v1751, 0
      %v1764 = vsel %vm194, %v1755, 0
      %1766 = vmatpush.bf16.msra.mxu0 0
      %1767 = vmatpush.bf16.msra.mxu0 0
      %1768 = vmatpush.bf16.msra.mxu0 0
      %1769 = vmatpush.bf16.msra.mxu0 0
      %1770 = vmatpush.bf16.msra.mxu0 0
      %1771 = vmatpush.bf16.msra.mxu0 0
      %1772 = vmatpush.bf16.msra.mxu0 %v1764
      %1773 = vmatpush.bf16.msra.mxu0 %v1753
      %1774 = vmatmul.bf16.gmra.mxu0 %v1758
      %v1775 = vpop.f32.mrf.mxu0
      %v1776 = vadd.f32 0.0, %v1775
      %v1777 = vpop.f32.mrf.mxu0
      %v1778 = vadd.f32 0.0, %v1777
      %1779 = vmatmul.bf16.gmra.mxu0 %v1761
      %v1780 = vpop.f32.mrf.mxu0
      %v1781 = vadd.f32 0.0, %v1780
      %v1782 = vpop.f32.mrf.mxu0
      %1783 = vdwg.mxu0
      %v1784 = vpack.c.bf16 %v1778, %v1776
      %v1785 = vpack.c.bf16 %v1781, %v1781
      %v1786 = vpack.c.b16 %v1354, %v1354
      %1787 = vrot.lane.b32.xlu0 %v1786, 32
      %v1788 = vpop.permute.xlu0 %1787
      %v1790 = vsel %vm190, %v1784, 0
      %v1793 = vsel %vm190, %v1785, 0
      %v1796 = vsel %vm194, %v1788, 0
      %1798 = vmatpush.bf16.msra.mxu0 0
      %1799 = vmatpush.bf16.msra.mxu0 0
      %1800 = vmatpush.bf16.msra.mxu0 0
      %1801 = vmatpush.bf16.msra.mxu0 0
      %1802 = vmatpush.bf16.msra.mxu0 0
      %1803 = vmatpush.bf16.msra.mxu0 0
      %1804 = vmatpush.bf16.msra.mxu0 0
      %1805 = vmatpush.bf16.msra.mxu0 %v1796
      %1806 = vmatmul.bf16.gmra.mxu0 %v1790
      %v1807 = vpop.f32.mrf.mxu0
      %v1808 = vadd.f32 0.0, %v1807
      %v1809 = vpop.f32.mrf.mxu0
      %v1810 = vadd.f32 0.0, %v1809
      %1811 = vmatmul.bf16.gmra.mxu0 %v1793
      %v1812 = vpop.f32.mrf.mxu0
      %v1813 = vadd.f32 0.0, %v1812
      %v1814 = vpop.f32.mrf.mxu0
      %1815 = vdwg.mxu0
      %v1816 = vpack.c.b16 %v1353, %v1353
      %1817 = vrot.lane.b32.xlu0 %v1816, 32
      %v1818 = vpop.permute.xlu0 %1817
      %v1820 = vsel %vm190, %v1742, 0
      %v1823 = vsel %vm190, %v1743, 0
      %v1826 = vsel %vm194, %v1818, 0
      %1828 = vmatpush.bf16.msra.mxu0 0
      %1829 = vmatpush.bf16.msra.mxu0 0
      %1830 = vmatpush.bf16.msra.mxu0 0
      %1831 = vmatpush.bf16.msra.mxu0 0
      %1832 = vmatpush.bf16.msra.mxu0 0
      %1833 = vmatpush.bf16.msra.mxu0 0
      %1834 = vmatpush.bf16.msra.mxu0 0
      %1835 = vmatpush.bf16.msra.mxu0 %v1826
      %1836 = vmatmul.bf16.gmra.mxu0 %v1820
      %v1837 = vpop.f32.mrf.mxu0
      %v1838 = vadd.f32 %v1808, %v1837
      %v1839 = vpop.f32.mrf.mxu0
      %v1840 = vadd.f32 %v1810, %v1839
      %1841 = vmatmul.bf16.gmra.mxu0 %v1823
      %v1842 = vpop.f32.mrf.mxu0
      %v1843 = vadd.f32 %v1813, %v1842
      %v1844 = vpop.f32.mrf.mxu0
      %1845 = vdwg.mxu0
      %v1849 = vunpack.c.l.b16 %v1696
      %v1850 = vunpack.c.l.b16 %v1697
      %v1851 = vunpack.c.l.b16 %v1698
      %v1852 = vpack.c.b16 %v1850, %v1849
      %v1853 = vpack.c.b16 %v1851, %v1851
      %1854 = vrot.lane.b32.xlu0 %v1408, 48
      %v1855 = vpop.permute.xlu0 %1854
      %1856 = vrot.lane.b32.xlu0 %v1409, 48
      %v1857 = vpop.permute.xlu0 %1856
      %v1860 = vsel %vm632, %v1852, 0
      %v1863 = vsel %vm632, %v1853, 0
      %v1866 = vsel %vm194, %v1857, 0
      %1868 = vmatpush.bf16.msra.mxu0 0
      %1869 = vmatpush.bf16.msra.mxu0 0
      %1870 = vmatpush.bf16.msra.mxu0 0
      %1871 = vmatpush.bf16.msra.mxu0 0
      %1872 = vmatpush.bf16.msra.mxu0 0
      %1873 = vmatpush.bf16.msra.mxu0 0
      %1874 = vmatpush.bf16.msra.mxu0 %v1866
      %1875 = vmatpush.bf16.msra.mxu0 %v1855
      %1876 = vmatmul.bf16.gmra.mxu0 %v1860
      %v1877 = vpop.f32.mrf.mxu0
      %v1878 = vadd.f32 0.0, %v1877
      %v1879 = vpop.f32.mrf.mxu0
      %v1880 = vadd.f32 0.0, %v1879
      %1881 = vmatmul.bf16.gmra.mxu0 %v1863
      %v1882 = vpop.f32.mrf.mxu0
      %v1883 = vadd.f32 0.0, %v1882
      %v1884 = vpop.f32.mrf.mxu0
      %1885 = vdwg.mxu0
      %v1886 = vpack.c.bf16 %v1880, %v1878
      %v1887 = vpack.c.bf16 %v1883, %v1883
      %v1888 = vpack.c.b16 %v1355, %v1355
      %1889 = vrot.lane.b32.xlu0 %v1888, 32
      %v1890 = vpop.permute.xlu0 %1889
      %v1892 = vsel %vm190, %v1886, 0
      %v1895 = vsel %vm190, %v1887, 0
      %v1898 = vsel %vm194, %v1890, 0
      %1900 = vmatpush.bf16.msra.mxu0 0
      %1901 = vmatpush.bf16.msra.mxu0 0
      %1902 = vmatpush.bf16.msra.mxu0 0
      %1903 = vmatpush.bf16.msra.mxu0 0
      %1904 = vmatpush.bf16.msra.mxu0 0
      %1905 = vmatpush.bf16.msra.mxu0 0
      %1906 = vmatpush.bf16.msra.mxu0 0
      %1907 = vmatpush.bf16.msra.mxu0 %v1898
      %1908 = vmatmul.bf16.gmra.mxu0 %v1892
      %v1909 = vpop.f32.mrf.mxu0
      %v1910 = vadd.f32 0.0, %v1909
      %v1911 = vpop.f32.mrf.mxu0
      %v1912 = vadd.f32 0.0, %v1911
      %1913 = vmatmul.bf16.gmra.mxu0 %v1895
      %v1914 = vpop.f32.mrf.mxu0
      %v1915 = vadd.f32 0.0, %v1914
      %v1916 = vpop.f32.mrf.mxu0
      %1917 = vdwg.mxu0
      %v1918 = vadd.f32 %v1838, %v1910
      %v1919 = vadd.f32 %v1840, %v1912
      %v1920 = vadd.f32 %v1843, %v1915
      %v1924 = vunpack.c.l.b16 %v1699
      %v1925 = vunpack.c.l.b16 %v1700
      %v1926 = vunpack.c.l.b16 %v1701
      %v1927 = vpack.c.b16 %v1925, %v1924
      %v1928 = vpack.c.b16 %v1926, %v1926
      %1929 = vrot.lane.b32.xlu0 %v1408, 40
      %v1930 = vpop.permute.xlu0 %1929
      %1931 = vrot.lane.b32.xlu0 %v1409, 40
      %v1932 = vpop.permute.xlu0 %1931
      %v1935 = vsel %vm632, %v1927, 0
      %v1938 = vsel %vm632, %v1928, 0
      %v1941 = vsel %vm194, %v1932, 0
      %1943 = vmatpush.bf16.msra.mxu0 0
      %1944 = vmatpush.bf16.msra.mxu0 0
      %1945 = vmatpush.bf16.msra.mxu0 0
      %1946 = vmatpush.bf16.msra.mxu0 0
      %1947 = vmatpush.bf16.msra.mxu0 0
      %1948 = vmatpush.bf16.msra.mxu0 0
      %1949 = vmatpush.bf16.msra.mxu0 %v1941
      %1950 = vmatpush.bf16.msra.mxu0 %v1930
      %1951 = vmatmul.bf16.gmra.mxu0 %v1935
      %v1952 = vpop.f32.mrf.mxu0
      %v1953 = vadd.f32 0.0, %v1952
      %v1954 = vpop.f32.mrf.mxu0
      %v1955 = vadd.f32 0.0, %v1954
      %1956 = vmatmul.bf16.gmra.mxu0 %v1938
      %v1957 = vpop.f32.mrf.mxu0
      %v1958 = vadd.f32 0.0, %v1957
      %v1959 = vpop.f32.mrf.mxu0
      %1960 = vdwg.mxu0
      %v1961 = vpack.c.bf16 %v1955, %v1953
      %v1962 = vpack.c.bf16 %v1958, %v1958
      %v1963 = vpack.c.b16 %v1356, %v1356
      %1964 = vrot.lane.b32.xlu0 %v1963, 32
      %v1965 = vpop.permute.xlu0 %1964
      %v1967 = vsel %vm190, %v1961, 0
      %v1970 = vsel %vm190, %v1962, 0
      %v1973 = vsel %vm194, %v1965, 0
      %1975 = vmatpush.bf16.msra.mxu0 0
      %1976 = vmatpush.bf16.msra.mxu0 0
      %1977 = vmatpush.bf16.msra.mxu0 0
      %1978 = vmatpush.bf16.msra.mxu0 0
      %1979 = vmatpush.bf16.msra.mxu0 0
      %1980 = vmatpush.bf16.msra.mxu0 0
      %1981 = vmatpush.bf16.msra.mxu0 0
      %1982 = vmatpush.bf16.msra.mxu0 %v1973
      %1983 = vmatmul.bf16.gmra.mxu0 %v1967
      %v1984 = vpop.f32.mrf.mxu0
      %v1985 = vadd.f32 0.0, %v1984
      %v1986 = vpop.f32.mrf.mxu0
      %v1987 = vadd.f32 0.0, %v1986
      %1988 = vmatmul.bf16.gmra.mxu0 %v1970
      %v1989 = vpop.f32.mrf.mxu0
      %v1990 = vadd.f32 0.0, %v1989
      %v1991 = vpop.f32.mrf.mxu0
      %1992 = vdwg.mxu0
      %v1993 = vadd.f32 %v1918, %v1985
      %v1994 = vadd.f32 %v1919, %v1987
      %v1995 = vadd.f32 %v1920, %v1990
      %v1996 = vadd.f32 %v1258, %v1993
      %v1997 = vadd.f32 %v1259, %v1994
      %v1998 = vadd.f32 %v1260, %v1995
      %v1999 = vperm.slane %v178, 3
      %v2000 = vadd.f32 %v1996, %v1999
      %v2001 = vadd.f32 %v1997, %v1999
      %v2002 = vadd.f32 %v1998, %v1999
      %v2003 = vsel %vm332, %v2000, 0.0
      %2004 = vadd.xlane.f32.xlu0 %v2003
      %v2005 = vpop.xlane.xlu0 %2004
      %v2006 = vsel %vm332, %v2001, 0.0
      %2007 = vadd.xlane.f32.xlu0 %v2006
      %v2008 = vpop.xlane.xlu0 %2007
      %v2009 = vsel %vm332, %v2002, 0.0
      %2010 = vadd.xlane.f32.xlu0 %v2009
      %v2011 = vpop.xlane.xlu0 %2010
      %v2012 = vmul.f32 %v2005, %v348
      %v2013 = vmul.f32 %v2008, %v348
      %v2014 = vmul.f32 %v2011, %v348
      %v2015 = vmul.f32 %v2000, %v2000
      %v2016 = vmul.f32 %v2001, %v2001
      %v2017 = vmul.f32 %v2002, %v2002
      %v2018 = vsel %vm332, %v2015, 0.0
      %2019 = vadd.xlane.f32.xlu0 %v2018
      %v2020 = vpop.xlane.xlu0 %2019
      %v2021 = vsel %vm332, %v2016, 0.0
      %2022 = vadd.xlane.f32.xlu0 %v2021
      %v2023 = vpop.xlane.xlu0 %2022
      %v2024 = vsel %vm332, %v2017, 0.0
      %2025 = vadd.xlane.f32.xlu0 %v2024
      %v2026 = vpop.xlane.xlu0 %2025
      %v2027 = vmul.f32 %v2020, %v348
      %v2028 = vmul.f32 %v2023, %v348
      %v2029 = vmul.f32 %v2026, %v348
      %v2030 = vmul.f32 %v2012, %v2012
      %v2031 = vmul.f32 %v2013, %v2013
      %v2032 = vmul.f32 %v2014, %v2014
      %v2033 = vsub.f32 %v2027, %v2030
      %v2034 = vsub.f32 %v2028, %v2031
      %v2035 = vsub.f32 %v2029, %v2032
      %v2036 = vsub.f32 %v2000, %v2012
      %v2037 = vsub.f32 %v2001, %v2013
      %v2038 = vsub.f32 %v2002, %v2014
      %v2039 = vadd.f32 %v2033, 1e-05
      %v2040 = vadd.f32 %v2034, 1e-05
      %v2041 = vadd.f32 %v2035, 1e-05
      %v2042 = vrsqrt.pop %v2039
      %v2043 = vmul.f32 %v2042, %v2039
      %v2044 = vmul.f32 %v2043, %v2042
      %v2045 = vmul.f32 0.5, %v2044
      %v2046 = vsub.f32 1.5, %v2045
      %v2047 = vmul.f32 %v2042, %v2046
      %vm2048 = vweird.f32 %v2039
      %vm2049 = vweird.f32 %v2042
      %vm2050 = vmor %vm2048, %vm2049
      %v2051 = vsel %vm2050, %v2042, %v2047
      %v2052 = vrsqrt.pop %v2040
      %v2053 = vmul.f32 %v2052, %v2040
      %v2054 = vmul.f32 %v2053, %v2052
      %v2055 = vmul.f32 0.5, %v2054
      %v2056 = vsub.f32 1.5, %v2055
      %v2057 = vmul.f32 %v2052, %v2056
      %vm2058 = vweird.f32 %v2040
      %vm2059 = vweird.f32 %v2052
      %vm2060 = vmor %vm2058, %vm2059
      %v2061 = vsel %vm2060, %v2052, %v2057
      %v2062 = vrsqrt.pop %v2041
      %v2063 = vmul.f32 %v2062, %v2041
      %v2064 = vmul.f32 %v2063, %v2062
      %v2065 = vmul.f32 0.5, %v2064
      %v2066 = vsub.f32 1.5, %v2065
      %v2067 = vmul.f32 %v2062, %v2066
      %vm2068 = vweird.f32 %v2041
      %vm2069 = vweird.f32 %v2062
      %vm2070 = vmor %vm2068, %vm2069
      %v2071 = vsel %vm2070, %v2062, %v2067
      %v2072 = vmul.f32 %v2036, %v2051
      %v2073 = vmul.f32 %v2037, %v2061
      %v2074 = vmul.f32 %v2038, %v2071
      %v2075 = vperm.slane %v178, 4
      %v2076 = vmul.f32 %v2072, %v2075
      %v2077 = vmul.f32 %v2073, %v2075
      %v2078 = vmul.f32 %v2074, %v2075
      %v2079 = vperm.slane %v178, 5
      %v2080 = vadd.f32 %v2076, %v2079
      %v2081 = vadd.f32 %v2077, %v2079
      %v2082 = vadd.f32 %v2078, %v2079
      %v2083 = vpack.c.bf16 %v2081, %v2080
      %v2084 = vpack.c.bf16 %v2082, %v2082
      %v2085 = vperm.slane %v178, 6
      %v2086 = vunpack.c.h.b16 %v1262
      %v2087 = vunpack.c.h.b16 %v1263
      %v2088 = vunpack.c.h.b16 %v1264
      %v2089 = vunpack.c.h.b16 %v1265
      %v2090 = vpack.c.b16 %v2087, %v2086
      %v2091 = vpack.c.b16 %v2089, %v2088
      %v2095 = vsel %vm332, %v2083, 0
      %v2098 = vsel %vm332, %v2084, 0
      %2100 = vmatpush.bf16.msra.mxu0 0
      %2101 = vmatpush.bf16.msra.mxu0 0
      %2102 = vmatpush.bf16.msra.mxu0 0
      %2103 = vmatpush.bf16.msra.mxu0 0
      %2104 = vmatpush.bf16.msra.mxu0 0
      %2105 = vmatpush.bf16.msra.mxu0 0
      %2106 = vmatpush.bf16.msra.mxu0 %v2091
      %2107 = vmatpush.bf16.msra.mxu0 %v2090
      %2108 = vmatmul.bf16.gmra.mxu0 %v2095
      %v2109 = vpop.f32.mrf.mxu0
      %v2110 = vadd.f32 %v2085, %v2109
      %v2111 = vpop.f32.mrf.mxu0
      %v2112 = vadd.f32 %v2085, %v2111
      %2113 = vmatmul.bf16.gmra.mxu0 %v2098
      %v2114 = vpop.f32.mrf.mxu0
      %v2115 = vadd.f32 %v2085, %v2114
      %v2116 = vpop.f32.mrf.mxu0
      %2117 = vdwg.mxu0
      %v2118 = vmul.f32 %v2110, %v2110
      %v2119 = vmul.f32 %v2112, %v2112
      %v2120 = vmul.f32 %v2115, %v2115
      %v2121 = vmul.f32 %v2110, %v2118
      %v2122 = vmul.f32 %v2112, %v2119
      %v2123 = vmul.f32 %v2115, %v2120
      %v2124 = vmul.f32 %v2121, 0.044715
      %v2125 = vmul.f32 %v2122, 0.044715
      %v2126 = vmul.f32 %v2123, 0.044715
      %v2127 = vadd.f32 %v2110, %v2124
      %v2128 = vadd.f32 %v2112, %v2125
      %v2129 = vadd.f32 %v2115, %v2126
      %v2130 = vmul.f32 %v2127, 0.7978846
      %v2131 = vmul.f32 %v2128, 0.7978846
      %v2132 = vmul.f32 %v2129, 0.7978846
      %v2133 = vtanh.pop %v2130
      %v2134 = vtanh.pop %v2131
      %v2135 = vtanh.pop %v2132
      %v2136 = vadd.f32 %v2133, 1.0
      %v2137 = vadd.f32 %v2134, 1.0
      %v2138 = vadd.f32 %v2135, 1.0
      %v2139 = vmul.f32 %v2136, 0.5
      %v2140 = vmul.f32 %v2137, 0.5
      %v2141 = vmul.f32 %v2138, 0.5
      %v2142 = vmul.f32 %v2110, %v2139
      %v2143 = vmul.f32 %v2112, %v2140
      %v2144 = vmul.f32 %v2115, %v2141
      %v2145 = vpack.c.bf16 %v2143, %v2142
      %v2146 = vpack.c.bf16 %v2144, %v2144
      %v2147 = vperm.slane %v178, 7
      %2148 = vrot.lane.b32.xlu0 %v2090, 64
      %v2149 = vpop.permute.xlu0 %2148
      %2150 = vrot.lane.b32.xlu0 %v2091, 64
      %v2151 = vpop.permute.xlu0 %2150
      %v2153 = vsel %vm1227, %v2145, 0
      %v2156 = vsel %vm1227, %v2146, 0
      %v2159 = vsel %vm1227, %v2149, 0
      %v2162 = vsel %vm1227, %v2151, 0
      %2164 = vmatpush.bf16.xpose.msra.mxu0 0
      %2165 = vmatpush.bf16.xpose.msra.mxu0 0
      %2166 = vmatpush.bf16.xpose.msra.mxu0 0
      %2167 = vmatpush.bf16.xpose.msra.mxu0 0
      %2168 = vmatpush.bf16.xpose.msra.mxu0 0
      %2169 = vmatpush.bf16.xpose.msra.mxu0 0
      %2170 = vmatpush.bf16.xpose.msra.mxu0 %v2162
      %2171 = vmatpush.bf16.xpose.msra.mxu0 %v2159
      %2172 = vmatmul.bf16.gmra.mxu0 %v2153
      %v2173 = vpop.f32.mrf.mxu0
      %v2174 = vadd.f32 %v2147, %v2173
      %v2175 = vpop.f32.mrf.mxu0
      %v2176 = vadd.f32 %v2147, %v2175
      %2177 = vmatmul.bf16.gmra.mxu0 %v2156
      %v2178 = vpop.f32.mrf.mxu0
      %v2179 = vadd.f32 %v2147, %v2178
      %v2180 = vpop.f32.mrf.mxu0
      %2181 = vdwg.mxu0
      %v2182 = vadd.f32 %v2000, %v2174
      %v2183 = vadd.f32 %v2001, %v2176
      %v2184 = vadd.f32 %v2002, %v2179
      %v2185 = vsel %vm332, %v2182, 0.0
      %2186 = vadd.xlane.f32.xlu0 %v2185
      %v2187 = vpop.xlane.xlu0 %2186
      %v2188 = vsel %vm332, %v2183, 0.0
      %2189 = vadd.xlane.f32.xlu0 %v2188
      %v2190 = vpop.xlane.xlu0 %2189
      %v2191 = vsel %vm332, %v2184, 0.0
      %2192 = vadd.xlane.f32.xlu0 %v2191
      %v2193 = vpop.xlane.xlu0 %2192
      %v2194 = vmul.f32 %v2187, %v348
      %v2195 = vmul.f32 %v2190, %v348
      %v2196 = vmul.f32 %v2193, %v348
      %v2197 = vmul.f32 %v2182, %v2182
      %v2198 = vmul.f32 %v2183, %v2183
      %v2199 = vmul.f32 %v2184, %v2184
      %v2200 = vsel %vm332, %v2197, 0.0
      %2201 = vadd.xlane.f32.xlu0 %v2200
      %v2202 = vpop.xlane.xlu0 %2201
      %v2203 = vsel %vm332, %v2198, 0.0
      %2204 = vadd.xlane.f32.xlu0 %v2203
      %v2205 = vpop.xlane.xlu0 %2204
      %v2206 = vsel %vm332, %v2199, 0.0
      %2207 = vadd.xlane.f32.xlu0 %v2206
      %v2208 = vpop.xlane.xlu0 %2207
      %v2209 = vmul.f32 %v2202, %v348
      %v2210 = vmul.f32 %v2205, %v348
      %v2211 = vmul.f32 %v2208, %v348
      %v2212 = vmul.f32 %v2194, %v2194
      %v2213 = vmul.f32 %v2195, %v2195
      %v2214 = vmul.f32 %v2196, %v2196
      %v2215 = vsub.f32 %v2209, %v2212
      %v2216 = vsub.f32 %v2210, %v2213
      %v2217 = vsub.f32 %v2211, %v2214
      %v2218 = vsub.f32 %v2182, %v2194
      %v2219 = vsub.f32 %v2183, %v2195
      %v2220 = vsub.f32 %v2184, %v2196
      %v2221 = vadd.f32 %v2215, 1e-05
      %v2222 = vadd.f32 %v2216, 1e-05
      %v2223 = vadd.f32 %v2217, 1e-05
      %v2224 = vrsqrt.pop %v2221
      %v2225 = vmul.f32 %v2224, %v2221
      %v2226 = vmul.f32 %v2225, %v2224
      %v2227 = vmul.f32 0.5, %v2226
      %v2228 = vsub.f32 1.5, %v2227
      %v2229 = vmul.f32 %v2224, %v2228
      %vm2230 = vweird.f32 %v2221
      %vm2231 = vweird.f32 %v2224
      %vm2232 = vmor %vm2230, %vm2231
      %v2233 = vsel %vm2232, %v2224, %v2229
      %v2234 = vrsqrt.pop %v2222
      %v2235 = vmul.f32 %v2234, %v2222
      %v2236 = vmul.f32 %v2235, %v2234
      %v2237 = vmul.f32 0.5, %v2236
      %v2238 = vsub.f32 1.5, %v2237
      %v2239 = vmul.f32 %v2234, %v2238
      %vm2240 = vweird.f32 %v2222
      %vm2241 = vweird.f32 %v2234
      %vm2242 = vmor %vm2240, %vm2241
      %v2243 = vsel %vm2242, %v2234, %v2239
      %v2244 = vrsqrt.pop %v2223
      %v2245 = vmul.f32 %v2244, %v2223
      %v2246 = vmul.f32 %v2245, %v2244
      %v2247 = vmul.f32 0.5, %v2246
      %v2248 = vsub.f32 1.5, %v2247
      %v2249 = vmul.f32 %v2244, %v2248
      %vm2250 = vweird.f32 %v2223
      %vm2251 = vweird.f32 %v2244
      %vm2252 = vmor %vm2250, %vm2251
      %v2253 = vsel %vm2252, %v2244, %v2249
      %v2254 = vmul.f32 %v2218, %v2233
      %v2255 = vmul.f32 %v2219, %v2243
      %v2256 = vmul.f32 %v2220, %v2253
      %v2257 = vperm.slane %v175, 3
      %v2258 = vmul.f32 %v2254, %v2257
      %v2259 = vmul.f32 %v2255, %v2257
      %v2260 = vmul.f32 %v2256, %v2257
      %v2261 = vperm.slane %v175, 4
      %v2262 = vadd.f32 %v2258, %v2261
      %v2263 = vadd.f32 %v2259, %v2261
      %v2264 = vadd.f32 %v2260, %v2261
      %v2265 = vpack.c.bf16 %v2263, %v2262
      %v2266 = vpack.c.bf16 %v2264, %v2264
      %v2267 = vperm.slane %v175, 5
      %v2269 = vsel %vm332, %v2265, 0
      %v2272 = vsel %vm332, %v2266, 0
      %v2275 = vsel %vm332, %v182, 0
      %2277 = vmatpush.bf16.xpose.msra.mxu0 0
      %2278 = vmatpush.bf16.xpose.msra.mxu0 0
      %2279 = vmatpush.bf16.xpose.msra.mxu0 0
      %2280 = vmatpush.bf16.xpose.msra.mxu0 0
      %2281 = vmatpush.bf16.xpose.msra.mxu0 0
      %2282 = vmatpush.bf16.xpose.msra.mxu0 0
      %2283 = vmatpush.bf16.xpose.msra.mxu0 0
      %2284 = vmatpush.bf16.xpose.msra.mxu0 %v2275
      %2285 = vmatmul.bf16.gmra.mxu0 %v2269
      %v2286 = vpop.f32.mrf.mxu0
      %v2287 = vadd.f32 %v2267, %v2286
      %v2288 = vpop.f32.mrf.mxu0
      %v2289 = vadd.f32 %v2267, %v2288
      %2290 = vmatmul.bf16.gmra.mxu0 %v2272
      %v2291 = vpop.f32.mrf.mxu0
      %v2292 = vadd.f32 %v2267, %v2291
      %v2293 = vpop.f32.mrf.mxu0
      %2294 = vdwg.mxu0
      %2298 = vrot.lane.b32.xlu0 %v2182, 32
      %v2299 = vpop.permute.xlu0 %2298
      %2300 = vrot.lane.b32.xlu0 %v2183, 32
      %v2301 = vpop.permute.xlu0 %2300
      %2302 = vrot.lane.b32.xlu0 %v2184, 32
      %v2303 = vpop.permute.xlu0 %2302
      %2310 = vrot.lane.b32.xlu0 %v2287, 64
      %v2311 = vpop.permute.xlu0 %2310
      %2312 = vrot.lane.b32.xlu0 %v2289, 64
      %v2313 = vpop.permute.xlu0 %2312
      %2314 = vrot.lane.b32.xlu0 %v2292, 64
      %v2315 = vpop.permute.xlu0 %2314
      %v2319 = vsel %vm332, %v1258, %v2299
      %v2320 = vsel %vm332, %v1259, %v2301
      %v2321 = vsel %vm332, %v1260, %v2303
      %v2322 = vsel %vm1227, %v2319, %v2311
      %v2323 = vsel %vm1227, %v2320, %v2313
      %v2324 = vsel %vm1227, %v2321, %v2315
      %vm2325 = vcmask 556032
      %v2326 = vsel %vm2325, %v2322, 0.0
      %v2327 = vsel %vm2325, %v2323, 0.0
      %v2328 = vsel %vm2325, %v2324, 0.0
      %2329 = vst [vmem:[%s170] sm:$0xff] %v2326
      %2330 = vst [vmem:[%s170 + $0x8] sm:$0xff] %v2327
      %2331 = vst [vmem:[%s170 + $0x10] sm:$0xff] %v2328
      %p2332 = scmp.lt.s32.totalorder %s14, 3
      %s2333 = scalar_select %p2332, %s14, 3
      %s2334 = smul.addr %s2333, 3
      %s2335 = smul.addr %s2334, 8
      %s2336 = scalar_lea.vmem %s3, %s2335
      // Predicated region
      $region33: #{tokengt_forward.1} parent=31 // pred_check
        %p2337 = pneg %p100
      $region34: #{tokengt_forward.1} parent=31 // pred_check_branch
        %2339 = sbr.rel (%p2337) target = $region36
      $region35: #{tokengt_forward.1} parent=31 // pred_region
        _
      $region36: #{tokengt_forward.1} parent=31 // pred_fallthru
        _
    $region32: #{tokengt_forward.1} parent=5 // pred_fallthru
      _
    %p2340 = scmp.le.s32.totalorder 2, %s9
    // Predicated region
    $region37: #{tokengt_forward.1} parent=5 // pred_check
      %p2341 = pneg %p2340
    $region38: #{tokengt_forward.1} parent=5 // pred_check_branch
      %2343 = sbr.rel (%p2341) target = $region40
    $region39: #{tokengt_forward.1} parent=5 // pred_region
      %s2344 = ssub.s32 %s9, 2
      // Predicated region
      $region41: #{tokengt_forward.1} parent=39 // pred_check
        %p2345 = pneg %p106
      $region42: #{tokengt_forward.1} parent=39 // pred_check_branch
        %2347 = sbr.rel (%p2345) target = $region44
      $region43: #{tokengt_forward.1} parent=39 // pred_region
        %p2348 = scmp.lt.s32.totalorder %s15, 3
        %s2349 = scalar_select %p2348, %s15, 3
        %s2350 = smul.addr %s2349, 3
        %s2351 = smul.addr %s2350, 8
        %s2352 = scalar_lea.vmem %s3, %s2351
      $region44: #{tokengt_forward.1} parent=39 // pred_fallthru
        _
    $region40: #{tokengt_forward.1} parent=5 // pred_fallthru
      _
  $region6: #{tokengt_forward.1} parent=0 // loop_footer
    %s13 = sadd.s32 1, %s9
  $region7: #{tokengt_forward.1} parent=0 // loop_footer_branch
    %8 = sbr.rel target = $region3
  $region8: #{tokengt_forward.1} parent=0 // loop_exit
    _

</llo_original>
